<compile_context>
chip_gen: v7x
topology: tpu7x:2x2x1
jax: 0.10.0
libtpu: 0.0.40
codegen_flags: <defaults>
</compile_context>

<pallas_src>
import functools
import math

import jax
import jax.numpy as jnp
from jax import lax
from jax.experimental import pallas as pl
from jax.experimental.pallas import tpu as pltpu

_LOG_SQRT_2PI = 0.5 * math.log(2.0 * math.pi)


def _round_up(x, m):
    return ((x + m - 1) // m) * m


def _ppo_cas_actor_kernel(
    obs_ref,      # (TB, O)
    eps_ref,      # (TB, A)
    w0_ref,       # (O, H)   VMEM-resident (constant index_map)
    b0_ref,       # (1, H)
    w1_ref,       # (H, H)
    b1_ref,       # (1, H)
    wm_ref,       # (H, A)
    bm_ref,       # (1, A)
    logstd_ref,   # (1, A)
    fused_ref,    # (TB, 2A+1) out: [action | mean | -0.5*sum(eps^2)]
    zcount_ref,   # (1, 2H)    out: per-tile zero-count sums [h0 | h1]
    *,
    batch_size,   # static: true batch size (for edge-tile masking)
    tile_b,       # static: batch tile size
):
    a_width = eps_ref.shape[-1]
    h_width = w0_ref.shape[-1]
    needs_mask = (batch_size % tile_b) != 0   # static: trace mask only if needed

    x = obs_ref[...]

    # hidden layer 0: LayDense (linear + ReLU)
    h0 = jnp.dot(x, w0_ref[...], preferred_element_type=jnp.float32) + b0_ref[...]
    h0 = jnp.maximum(h0, 0.0)

    # hidden layer 1
    h1 = jnp.dot(h0.astype(w1_ref.dtype), w1_ref[...],
                 preferred_element_type=jnp.float32) + b1_ref[...]
    h1 = jnp.maximum(h1, 0.0)

    # action-mean head (no activation)
    mean = jnp.dot(h1.astype(wm_ref.dtype), wm_ref[...],
                   preferred_element_type=jnp.float32) + bm_ref[...]

    # Normal(mean, std).sample() with externally supplied standard-normal eps
    std = jnp.exp(logstd_ref[...].astype(jnp.float32))          # (1, A)
    eps = eps_ref[...].astype(jnp.float32)                      # (TB, A)
    action = mean + std * eps

    # log_prob core: -(action-mean)^2/(2 std^2) == -0.5*eps^2 ; the constant
    # (-sum(logstd) - A*log(sqrt(2pi))) is added once in the wrapper.
    lp_rows = -0.5 * jnp.sum(eps * eps, axis=-1, keepdims=True)  # (TB, 1)

    # One fused output window: [action | mean | lp_rows] -> three static lane-slice
    # stores into a single (TB, 2A+1) slab (one output pipeline / DMA per step).
    fused_ref[:, 0:a_width] = action.astype(fused_ref.dtype)
    fused_ref[:, a_width:2 * a_width] = mean.astype(fused_ref.dtype)
    fused_ref[:, 2 * a_width:2 * a_width + 1] = lp_rows.astype(fused_ref.dtype)

    # Zero-fraction partial sums.  Row mask (computed once) drops edge-tile rows
    # that lie past the true batch (their input is garbage, not zeros).
    if needs_mask:
        row = pl.program_id(0) * tile_b + lax.broadcasted_iota(
            jnp.int32, (tile_b, 1), 0)
        valid = (row < batch_size).astype(jnp.float32)           # (TB, 1)
    else:
        valid = None

    def zcount(h):
        z = (h == 0.0).astype(jnp.float32)                       # (TB, H)
        if valid is not None:
            z = z * valid
        return jnp.sum(z, axis=0, keepdims=True)                 # (1, H)

    zcount_ref[:, 0:h_width] = zcount(h0)
    zcount_ref[:, h_width:2 * h_width] = zcount(h1)


def ppo_cas_actor_forward(obs, params, eps, *, tile_b=None,
                          compute_dtype=jnp.float32,
                          out_dtype=jnp.float32):
    """Batch-tiled Pallas forward of PPOCASActorModule (lay_norm=False path).

    compute_dtype: dtype of the matmul operands (obs/weights).  bf16 is valid on
      v5e/v6e/v7x (MXU-native); accumulation + elementwise math stay f32.
    out_dtype: dtype of the fused per-row output slab (action/mean/logprob core).
      bf16 halves output HBM traffic on v6e/v7x; note logprob then carries bf16
      rounding.  The f32 defaults match the torch module numerically.
    """
    B, O = obs.shape
    A = params["action_logstd"].shape[-1]
    H = params["b0"].shape[-1]
    fuse_w = 2 * A + 1

    eb = jnp.dtype(compute_dtype).itemsize
    ob = jnp.dtype(out_dtype).itemsize
    # Sublane-packing granule: 8 rows for f32, 16 for bf16, 32 for 1-byte dtypes.
    granule = max(8, 32 // eb)

    # Per-row VMEM footprint: double-buffered input/output tiles + f32 hiddens/flags.
    row_bytes = 2 * (O * eb + A * 4 + fuse_w * ob) + 4 * H * 4
    weight_bytes = (O * H + H * H + H * A) * eb + (2 * H + 2 * A) * 4
    vmem_budget = 20 * 1024 * 1024   # compute budget; scoped limit set to 32 MiB below
    max_rows = max(granule,
                   ((vmem_budget - weight_bytes) // max(row_bytes, 1))
                   // granule * granule)

    if tile_b is None:
        # Fat tiles (amortize ~600-cycle/step overhead) but keep >= 2 tiles so the
        # "parallel" batch axis shards across both TensorCores on v7x.
        tile_b = _round_up(max(1, pl.cdiv(B, 2)), granule)
    tile_b = _round_up(max(int(tile_b), granule), granule)
    tile_b = max(granule, min(tile_b, max_rows, _round_up(B, granule)))
    num_tiles = pl.cdiv(B, tile_b)

    # Operand casts: bf16 matmul operands on request; small vectors stay f32.
    obs_c = obs.astype(compute_dtype)
    eps_c = eps.astype(jnp.float32)
    w0 = params["w0"].astype(compute_dtype)
    w1 = params["w1"].astype(compute_dtype)
    wm = params["wm"].astype(compute_dtype)
    b0 = params["b0"].astype(jnp.float32)
    b1 = params["b1"].astype(jnp.float32)
    bm = params["bm"].astype(jnp.float32)
    logstd = params["action_logstd"].astype(jnp.float32).reshape(1, A)

    kernel = functools.partial(_ppo_cas_actor_kernel,
                               batch_size=B, tile_b=tile_b)

    # No wrapper-side padding: grid = cdiv(B, tile_b); Pallas masks edge-block
    # output writes, and the in-kernel row mask keeps zero-count sums exact.
    fused, zcounts = pl.pallas_call(
        kernel,
        grid=(num_tiles,),
        in_specs=[
            pl.BlockSpec((tile_b, O), lambda i: (i, 0)),      # obs   (tiled)
            pl.BlockSpec((tile_b, A), lambda i: (i, 0)),      # eps   (tiled)
            pl.BlockSpec((O, H), lambda i: (0, 0)),           # w0    (resident)
            pl.BlockSpec((1, H), lambda i: (0, 0)),           # b0
            pl.BlockSpec((H, H), lambda i: (0, 0)),           # w1
            pl.BlockSpec((1, H), lambda i: (0, 0)),           # b1
            pl.BlockSpec((H, A), lambda i: (0, 0)),           # wm
            pl.BlockSpec((1, A), lambda i: (0, 0)),           # bm
            pl.BlockSpec((1, A), lambda i: (0, 0)),           # logstd
        ],
        out_specs=(
            pl.BlockSpec((tile_b, fuse_w), lambda i: (i, 0)),   # fused per-row slab
            pl.BlockSpec((None, 1, 2 * H), lambda i: (i, 0, 0)),  # per-tile zero counts
        ),
        out_shape=(
            jax.ShapeDtypeStruct((B, fuse_w), out_dtype),
            jax.ShapeDtypeStruct((num_tiles, 1, 2 * H), jnp.float32),
        ),
        compiler_params=pltpu.CompilerParams(
            dimension_semantics=("parallel",),
            vmem_limit_bytes=32 * 1024 * 1024,   # safe on v5e/v6e (128 MiB) and v7x (64 MiB)
        ),
    )(obs_c, eps_c, w0, b0, w1, b1, wm, bm, logstd)

    # Un-fuse per-row outputs; finish the hoisted logprob constant here.
    action = fused[:, 0:A].astype(jnp.float32)
    mean = fused[:, A:2 * A].astype(jnp.float32)
    lp_const = -jnp.sum(logstd) - A * _LOG_SQRT_2PI
    logprob = fused[:, 2 * A].astype(jnp.float32) + lp_const

    # Zero-fraction mean across batch tiles (partial sums -> mean).
    zeroes = jnp.sum(zcounts[:, 0, :], axis=0) / jnp.float32(B)   # (2*H,)

    # Entropy is batch-independent: sum_a(0.5 + 0.5*log(2pi) + logstd_a).
    ent = jnp.sum(0.5 + _LOG_SQRT_2PI + logstd)
    entropy = jnp.broadcast_to(ent, (B,))

    return {
        "action": action,
        "logprob": logprob,
        "entropy": entropy,
        "zeroes": zeroes,
        # torch returns a Distribution object; expose its parameters instead.
        "dist_mean": mean,
        "dist_std": jnp.broadcast_to(jnp.exp(logstd), (B, A)),
    }


def init_params(key, observation_width, hidden_width, action_width):
    """Deterministic init mirroring torch Linear default (uniform +/-1/sqrt(fan_in))."""
    ks = jax.random.split(key, 6)

    def lin(kw, kb, fan_in, fan_out):
        bound = 1.0 / math.sqrt(fan_in)
        w = jax.random.uniform(kw, (fan_in, fan_out), jnp.float32, -bound, bound)
        b = jax.random.uniform(kb, (1, fan_out), jnp.float32, -bound, bound)
        return w, b

    w0, b0 = lin(ks[0], ks[1], observation_width, hidden_width)
    w1, b1 = lin(ks[2], ks[3], hidden_width, hidden_width)
    wm, bm = lin(ks[4], ks[5], hidden_width, action_width)
    return {
        "w0": w0, "b0": b0,
        "w1": w1, "b1": b1,
        "wm": wm, "bm": bm,
        "action_logstd": jnp.zeros((1, action_width), jnp.float32),  # torch: zeros param
    }


if __name__ == "__main__":
    # Small shapes consistent with the module (n_hidden=2).  B is deliberately NOT
    # a multiple of the auto tile so the un-padded edge-block path is exercised:
    # auto tile_b = round_up(ceil(250/2), 8) = 128 -> 2 grid steps, last one partial.
    B = 250                  # batch of observations
    OBS_W = 24               # observation_width
    HID_W = 32               # hidden_width
    ACT_W = 8                # action_width

    key = jax.random.PRNGKey(0)
    k_obs, k_eps, k_par = jax.random.split(key, 3)

    obs = jax.random.normal(k_obs, (B, OBS_W), jnp.float32)
    eps = jax.random.normal(k_eps, (B, ACT_W), jnp.float32)   # Normal.sample noise
    params = init_params(k_par, OBS_W, HID_W, ACT_W)

    # f32 here so the reference comparison below is tight; compute_dtype/out_dtype
    # = bf16 is the recommended production setting on v5e/v6e/v7x for HBM traffic.
    out = ppo_cas_actor_forward(obs, params, eps,
                                compute_dtype=jnp.float32,
                                out_dtype=jnp.float32)
    jax.block_until_ready(out)

    # Pure-JAX reference of the same forward math (torch-form logprob).
    h0 = jnp.maximum(obs @ params["w0"] + params["b0"], 0.0)
    h1 = jnp.maximum(h0 @ params["w1"] + params["b1"], 0.0)
    mean_ref = h1 @ params["wm"] + params["bm"]
    std = jnp.exp(params["action_logstd"])
    action_ref = mean_ref + std * eps
    lp_ref = jnp.sum(
        -((action_ref - mean_ref) ** 2) / (2 * std * std)
        - params["action_logstd"] - _LOG_SQRT_2PI,
        axis=-1,
    )
    ent_ref = jnp.broadcast_to(
        jnp.sum(0.5 + _LOG_SQRT_2PI + params["action_logstd"], axis=-1), (B,)
    )
    z_ref = jnp.concatenate(
        [jnp.mean((h0 == 0).astype(jnp.float32), axis=0),
         jnp.mean((h1 == 0).astype(jnp.float32), axis=0)]
    )

    assert jnp.allclose(out["action"], action_ref, atol=1e-5)
    assert jnp.allclose(out["dist_mean"], mean_ref, atol=1e-5)
    assert jnp.allclose(out["logprob"], lp_ref, atol=1e-5)
    assert jnp.allclose(out["entropy"], ent_ref, atol=1e-5)
    # zeroes compares exact zero-counts; allow a couple of relu-boundary flips that
    # can differ between MXU and XLA accumulation order (1 flip = 1/B = 0.004).
    assert jnp.max(jnp.abs(out["zeroes"] - z_ref)) <= 0.01

    print("KERNEL_OK")
</pallas_src>

<mosaic_0001>
module attributes {stable_mosaic.version = 11 : i64} {
  func.func @_ppo_cas_actor_kernel(%arg0: i32, %arg1: memref<128x24xf32, #tpu.memory_space<vmem>>, %arg2: memref<128x8xf32, #tpu.memory_space<vmem>>, %arg3: memref<24x32xf32, #tpu.memory_space<vmem>>, %arg4: memref<1x32xf32, #tpu.memory_space<vmem>>, %arg5: memref<32x32xf32, #tpu.memory_space<vmem>>, %arg6: memref<1x32xf32, #tpu.memory_space<vmem>>, %arg7: memref<32x8xf32, #tpu.memory_space<vmem>>, %arg8: memref<1x8xf32, #tpu.memory_space<vmem>>, %arg9: memref<1x8xf32, #tpu.memory_space<vmem>>, %arg10: memref<128x17xf32, #tpu.memory_space<vmem>>, %arg11: memref<1x1x64xf32, #tpu.memory_space<vmem>>) attributes {dimension_semantics = [#tpu.dimension_semantics<parallel>], iteration_bounds = array<i64: 2>, scalar_prefetch = 0 : i64, scratch_operands = 0 : i64, tpu.core_type = #tpu.core_type<tc>, window_params = [{transform_indices = @transform_0, window_bounds = array<i64: 128, 24>}, {transform_indices = @transform_1, window_bounds = array<i64: 128, 8>}, {pipeline_mode = #tpu.pipeline_mode<synchronous>, transform_indices = @transform_2, window_bounds = array<i64: 24, 32>}, {pipeline_mode = #tpu.pipeline_mode<synchronous>, transform_indices = @transform_3, window_bounds = array<i64: 1, 32>}, {pipeline_mode = #tpu.pipeline_mode<synchronous>, transform_indices = @transform_4, window_bounds = array<i64: 32, 32>}, {pipeline_mode = #tpu.pipeline_mode<synchronous>, transform_indices = @transform_5, window_bounds = array<i64: 1, 32>}, {pipeline_mode = #tpu.pipeline_mode<synchronous>, transform_indices = @transform_6, window_bounds = array<i64: 32, 8>}, {pipeline_mode = #tpu.pipeline_mode<synchronous>, transform_indices = @transform_7, window_bounds = array<i64: 1, 8>}, {pipeline_mode = #tpu.pipeline_mode<synchronous>, transform_indices = @transform_8, window_bounds = array<i64: 1, 8>}, {transform_indices = @transform_9, window_bounds = array<i64: 128, 17>}, {transform_indices = @transform_10, window_bounds = array<i64: 1, 1, 64>}]} {
    %c0 = arith.constant 0 : index
    %c0_0 = arith.constant 0 : index
    %0 = vector.load %arg1[%c0, %c0_0] : memref<128x24xf32, #tpu.memory_space<vmem>>, vector<128x24xf32>
    %c0_1 = arith.constant 0 : index
    %c0_2 = arith.constant 0 : index
    %1 = vector.load %arg3[%c0_1, %c0_2] : memref<24x32xf32, #tpu.memory_space<vmem>>, vector<24x32xf32>
    %cst = arith.constant dense<0.000000e+00> : vector<128x32xf32>
    %2 = tpu.matmul %0, %1, %cst {dimension_numbers = #tpu.dot_dimension_numbers<[1], [0], [0], [1], [0, 0, 1, 1], [], []>} : vector<128x24xf32>, vector<24x32xf32>, vector<128x32xf32> -> vector<128x32xf32>
    %c0_3 = arith.constant 0 : index
    %c0_4 = arith.constant 0 : index
    %3 = vector.load %arg4[%c0_3, %c0_4] : memref<1x32xf32, #tpu.memory_space<vmem>>, vector<1x32xf32>
    %4 = vector.broadcast %3 : vector<1x32xf32> to vector<128x32xf32>
    %5 = arith.addf %2, %4 : vector<128x32xf32>
    %cst_5 = arith.constant 0.000000e+00 : f32
    %6 = vector.broadcast %cst_5 : f32 to vector<128x32xf32>
    %7 = arith.maximumf %5, %6 : vector<128x32xf32>
    %c0_6 = arith.constant 0 : index
    %c0_7 = arith.constant 0 : index
    %8 = vector.load %arg5[%c0_6, %c0_7] : memref<32x32xf32, #tpu.memory_space<vmem>>, vector<32x32xf32>
    %cst_8 = arith.constant dense<0.000000e+00> : vector<128x32xf32>
    %9 = tpu.matmul %7, %8, %cst_8 {dimension_numbers = #tpu.dot_dimension_numbers<[1], [0], [0], [1], [0, 0, 1, 1], [], []>} : vector<128x32xf32>, vector<32x32xf32>, vector<128x32xf32> -> vector<128x32xf32>
    %c0_9 = arith.constant 0 : index
    %c0_10 = arith.constant 0 : index
    %10 = vector.load %arg6[%c0_9, %c0_10] : memref<1x32xf32, #tpu.memory_space<vmem>>, vector<1x32xf32>
    %11 = vector.broadcast %10 : vector<1x32xf32> to vector<128x32xf32>
    %12 = arith.addf %9, %11 : vector<128x32xf32>
    %cst_11 = arith.constant 0.000000e+00 : f32
    %13 = vector.broadcast %cst_11 : f32 to vector<128x32xf32>
    %14 = arith.maximumf %12, %13 : vector<128x32xf32>
    %c0_12 = arith.constant 0 : index
    %c0_13 = arith.constant 0 : index
    %15 = vector.load %arg7[%c0_12, %c0_13] : memref<32x8xf32, #tpu.memory_space<vmem>>, vector<32x8xf32>
    %cst_14 = arith.constant dense<0.000000e+00> : vector<128x8xf32>
    %16 = tpu.matmul %14, %15, %cst_14 {dimension_numbers = #tpu.dot_dimension_numbers<[1], [0], [0], [1], [0, 0, 1, 1], [], []>} : vector<128x32xf32>, vector<32x8xf32>, vector<128x8xf32> -> vector<128x8xf32>
    %c0_15 = arith.constant 0 : index
    %c0_16 = arith.constant 0 : index
    %17 = vector.load %arg8[%c0_15, %c0_16] : memref<1x8xf32, #tpu.memory_space<vmem>>, vector<1x8xf32>
    %18 = vector.broadcast %17 : vector<1x8xf32> to vector<128x8xf32>
    %19 = arith.addf %16, %18 : vector<128x8xf32>
    %c0_17 = arith.constant 0 : index
    %c0_18 = arith.constant 0 : index
    %20 = vector.load %arg9[%c0_17, %c0_18] : memref<1x8xf32, #tpu.memory_space<vmem>>, vector<1x8xf32>
    %21 = math.exp %20 : vector<1x8xf32>
    %c0_19 = arith.constant 0 : index
    %c0_20 = arith.constant 0 : index
    %22 = vector.load %arg2[%c0_19, %c0_20] : memref<128x8xf32, #tpu.memory_space<vmem>>, vector<128x8xf32>
    %23 = vector.broadcast %21 : vector<1x8xf32> to vector<128x8xf32>
    %24 = arith.mulf %23, %22 : vector<128x8xf32>
    %25 = arith.addf %19, %24 : vector<128x8xf32>
    %26 = arith.mulf %22, %22 : vector<128x8xf32>
    %cst_21 = arith.constant dense<0.000000e+00> : vector<128xf32>
    %27 = vector.multi_reduction <add>, %26, %cst_21 [1] : vector<128x8xf32> to vector<128xf32>
    %28 = vector.shape_cast %27 : vector<128xf32> to vector<128x1xf32>
    %cst_22 = arith.constant -5.000000e-01 : f32
    %29 = vector.broadcast %cst_22 : f32 to vector<128x1xf32>
    %30 = arith.mulf %29, %28 : vector<128x1xf32>
    %c0_23 = arith.constant 0 : index
    %c0_24 = arith.constant 0 : index
    %31 = vector.load %arg10[%c0_23, %c0_24] : memref<128x17xf32, #tpu.memory_space<vmem>>, vector<128x8xf32>
    tpu.vector_store %arg10[%c0_23, %c0_24], %25 {strides = array<i32>} : memref<128x17xf32, #tpu.memory_space<vmem>>, vector<128x8xf32>,
    %c0_25 = arith.constant 0 : index
    %c8 = arith.constant 8 : index
    %32 = vector.load %arg10[%c0_25, %c8] : memref<128x17xf32, #tpu.memory_space<vmem>>, vector<128x8xf32>
    tpu.vector_store %arg10[%c0_25, %c8], %19 {strides = array<i32>} : memref<128x17xf32, #tpu.memory_space<vmem>>, vector<128x8xf32>,
    %c0_26 = arith.constant 0 : index
    %c16 = arith.constant 16 : index
    %33 = vector.load %arg10[%c0_26, %c16] : memref<128x17xf32, #tpu.memory_space<vmem>>, vector<128x1xf32>
    tpu.vector_store %arg10[%c0_26, %c16], %30 {strides = array<i32>} : memref<128x17xf32, #tpu.memory_space<vmem>>, vector<128x1xf32>,
    %c128_i32 = arith.constant 128 : i32
    %34 = arith.muli %arg0, %c128_i32 : i32
    %35 = tpu.iota {dimensions = array<i32: 0>} : vector<128x1xi32>
    %36 = vector.broadcast %34 : i32 to vector<128x1xi32>
    %37 = arith.addi %36, %35 : vector<128x1xi32>
    %c250_i32 = arith.constant 250 : i32
    %38 = vector.broadcast %c250_i32 : i32 to vector<128x1xi32>
    %39 = arith.cmpi slt, %37, %38 : vector<128x1xi32>
    %40 = arith.extui %39 : vector<128x1xi1> to vector<128x1xi32>
    %41 = arith.sitofp %40 : vector<128x1xi32> to vector<128x1xf32>
    %cst_27 = arith.constant 0.000000e+00 : f32
    %42 = vector.broadcast %cst_27 : f32 to vector<128x32xf32>
    %43 = arith.cmpf oeq, %7, %42 : vector<128x32xf32>
    %44 = arith.extui %43 : vector<128x32xi1> to vector<128x32xi32>
    %45 = arith.sitofp %44 : vector<128x32xi32> to vector<128x32xf32>
    %46 = vector.broadcast %41 : vector<128x1xf32> to vector<128x32xf32>
    %47 = arith.mulf %45, %46 : vector<128x32xf32>
    %cst_28 = arith.constant dense<0.000000e+00> : vector<32xf32>
    %48 = vector.multi_reduction <add>, %47, %cst_28 [0] : vector<128x32xf32> to vector<32xf32>
    %49 = vector.shape_cast %48 : vector<32xf32> to vector<1x32xf32>
    %c0_29 = arith.constant 0 : index
    %c0_30 = arith.constant 0 : index
    %c0_31 = arith.constant 0 : index
    %50 = vector.load %arg11[%c0_29, %c0_30, %c0_31] : memref<1x1x64xf32, #tpu.memory_space<vmem>>, vector<1x1x32xf32>
    %51 = vector.shape_cast %50 : vector<1x1x32xf32> to vector<1x32xf32>
    %52 = vector.shape_cast %49 : vector<1x32xf32> to vector<1x1x32xf32>
    tpu.vector_store %arg11[%c0_29, %c0_30, %c0_31], %52 {strides = array<i32>} : memref<1x1x64xf32, #tpu.memory_space<vmem>>, vector<1x1x32xf32>,
    %cst_32 = arith.constant 0.000000e+00 : f32
    %53 = vector.broadcast %cst_32 : f32 to vector<128x32xf32>
    %54 = arith.cmpf oeq, %14, %53 : vector<128x32xf32>
    %55 = arith.extui %54 : vector<128x32xi1> to vector<128x32xi32>
    %56 = arith.sitofp %55 : vector<128x32xi32> to vector<128x32xf32>
    %57 = vector.broadcast %41 : vector<128x1xf32> to vector<128x32xf32>
    %58 = arith.mulf %56, %57 : vector<128x32xf32>
    %cst_33 = arith.constant dense<0.000000e+00> : vector<32xf32>
    %59 = vector.multi_reduction <add>, %58, %cst_33 [0] : vector<128x32xf32> to vector<32xf32>
    %60 = vector.shape_cast %59 : vector<32xf32> to vector<1x32xf32>
    %c0_34 = arith.constant 0 : index
    %c0_35 = arith.constant 0 : index
    %c32 = arith.constant 32 : index
    %61 = vector.load %arg11[%c0_34, %c0_35, %c32] : memref<1x1x64xf32, #tpu.memory_space<vmem>>, vector<1x1x32xf32>
    %62 = vector.shape_cast %61 : vector<1x1x32xf32> to vector<1x32xf32>
    %63 = vector.shape_cast %60 : vector<1x32xf32> to vector<1x1x32xf32>
    tpu.vector_store %arg11[%c0_34, %c0_35, %c32], %63 {strides = array<i32>} : memref<1x1x64xf32, #tpu.memory_space<vmem>>, vector<1x1x32xf32>,
    return
  }
  func.func @transform_0(%arg0: i32) -> (i32, i32) {
    %c0_i32 = arith.constant 0 : i32
    %c0_i32_0 = arith.constant 0 : i32
    return %arg0, %c0_i32 : i32, i32
  }
  func.func @transform_1(%arg0: i32) -> (i32, i32) {
    %c0_i32 = arith.constant 0 : i32
    %c0_i32_0 = arith.constant 0 : i32
    return %arg0, %c0_i32 : i32, i32
  }
  func.func @transform_2(%arg0: i32) -> (i32, i32) {
    %c0_i32 = arith.constant 0 : i32
    %c0_i32_0 = arith.constant 0 : i32
    %c0_i32_1 = arith.constant 0 : i32
    return %c0_i32, %c0_i32_0 : i32, i32
  }
  func.func @transform_3(%arg0: i32) -> (i32, i32) {
    %c0_i32 = arith.constant 0 : i32
    %c0_i32_0 = arith.constant 0 : i32
    %c0_i32_1 = arith.constant 0 : i32
    return %c0_i32, %c0_i32_0 : i32, i32
  }
  func.func @transform_4(%arg0: i32) -> (i32, i32) {
    %c0_i32 = arith.constant 0 : i32
    %c0_i32_0 = arith.constant 0 : i32
    %c0_i32_1 = arith.constant 0 : i32
    return %c0_i32, %c0_i32_0 : i32, i32
  }
  func.func @transform_5(%arg0: i32) -> (i32, i32) {
    %c0_i32 = arith.constant 0 : i32
    %c0_i32_0 = arith.constant 0 : i32
    %c0_i32_1 = arith.constant 0 : i32
    return %c0_i32, %c0_i32_0 : i32, i32
  }
  func.func @transform_6(%arg0: i32) -> (i32, i32) {
    %c0_i32 = arith.constant 0 : i32
    %c0_i32_0 = arith.constant 0 : i32
    %c0_i32_1 = arith.constant 0 : i32
    return %c0_i32, %c0_i32_0 : i32, i32
  }
  func.func @transform_7(%arg0: i32) -> (i32, i32) {
    %c0_i32 = arith.constant 0 : i32
    %c0_i32_0 = arith.constant 0 : i32
    %c0_i32_1 = arith.constant 0 : i32
    return %c0_i32, %c0_i32_0 : i32, i32
  }
  func.func @transform_8(%arg0: i32) -> (i32, i32) {
    %c0_i32 = arith.constant 0 : i32
    %c0_i32_0 = arith.constant 0 : i32
    %c0_i32_1 = arith.constant 0 : i32
    return %c0_i32, %c0_i32_0 : i32, i32
  }
  func.func @transform_9(%arg0: i32) -> (i32, i32) {
    %c0_i32 = arith.constant 0 : i32
    %c0_i32_0 = arith.constant 0 : i32
    return %arg0, %c0_i32 : i32, i32
  }
  func.func @transform_10(%arg0: i32) -> (i32, i32, i32) {
    %c0_i32 = arith.constant 0 : i32
    %c0_i32_0 = arith.constant 0 : i32
    %c0_i32_1 = arith.constant 0 : i32
    return %arg0, %c0_i32, %c0_i32_0 : i32, i32, i32
  }
}

</mosaic_0001>

<llo_original>
// kernel: tpu_custom_call.1
$region0: #{tpu_custom_call.1}
  #allocation0 [shape = 'u32[]', space=smem, size = 0x4, offset = 0x4, fixed_abs, tag = 'smem constant byte address 0x4 - core index']
  #allocation1 [shape = 'u32[144,128]{1,0:T(1,128)}', space=vmem, size = 0x12000, scoped, tag = 'internal scratch']
  %s0 = inlined_call_operand.vmem [shape: f32[250,24], index: 0, kind: input, shape index: {}]
  %s1 = inlined_call_operand.vmem [shape: f32[250,8], index: 1, kind: input, shape index: {}]
  %s2 = inlined_call_operand.vmem [shape: f32[24,32], index: 2, kind: input, shape index: {}]
  %s3 = inlined_call_operand.vmem [shape: f32[1,32], index: 3, kind: input, shape index: {}]
  %s4 = inlined_call_operand.vmem [shape: f32[32,32], index: 4, kind: input, shape index: {}]
  %s5 = inlined_call_operand.vmem [shape: f32[1,32], index: 5, kind: input, shape index: {}]
  %s6 = inlined_call_operand.vmem [shape: f32[32,8], index: 6, kind: input, shape index: {}]
  %s7 = inlined_call_operand.vmem [shape: f32[1,8], index: 7, kind: input, shape index: {}]
  %s8 = inlined_call_operand.vmem [shape: f32[1,8], index: 8, kind: input, shape index: {}]
  %s9 = inlined_call_operand.vmem [shape: f32[250,17], index: 9, kind: output, shape index: {0}]
  %s10 = inlined_call_operand.hbm [shape: f32[2,1,64], index: 10, kind: output, shape index: {1}]
  %11 = xla_tuple %s9, %s10
  %s12 = sld [smem:[#allocation0]]
  $region77: #{tpu_custom_call.1} parent=0
    _
  %s14 = ssub.s32 1, %s12
  %s15 = scalar_select 0, %s14, %s12
  $region1: #{tpu_custom_call.1} parent=0
    #allocation2 [shape = 'u8[1024]{0}', space=vmem, size = 0x400, scoped, tag = 'output window, operand 1']
    #allocation3 [shape = 's32[2]{0}', space=sflag, size = 0x8, scoped, tag = 'scoped memory for tpu_custom_call.1']
    %16 = vsyncpa [#allocation3], 0
    %s17 = scalar_lea.sflag [#allocation3], 1
    %18 = vsyncpa %s17, 0
    loop: start=0, step=1, limit=4
    $region2: #{tpu_custom_call.1} parent=1 // loop_pre_header
      _
    $region3: #{tpu_custom_call.1} parent=1 // loop_header
      %s20 = sphi 0, %s24
      %p21 = scmp.ge.s32.totalorder %s20, 4
      %s30 = sphi 0, %s32
      %s33 = sphi 0, %s30
      %s34 = sphi 0, %s33
      %s50 = sphi 0, %s34
      %s56 = sphi 0, %s58
      %s59 = sphi 0, %s56
      %s60 = sphi 0, %s59
      %s76 = sphi 0, %s60
      %s80 = sphi 0, %s80
      %s82 = sphi 0, %s80
      %s83 = sphi 0, %s82
      %s97 = sphi 0, %s83
      %s101 = sphi 0, %s101
      %s103 = sphi 0, %s101
      %s104 = sphi 0, %s103
      %s118 = sphi 0, %s104
      %s122 = sphi 0, %s122
      %s124 = sphi 0, %s122
      %s125 = sphi 0, %s124
      %s139 = sphi 0, %s125
      %s143 = sphi 0, %s143
      %s145 = sphi 0, %s143
      %s146 = sphi 0, %s145
      %s160 = sphi 0, %s146
      %s164 = sphi 0, %s164
      %s166 = sphi 0, %s164
      %s167 = sphi 0, %s166
      %s181 = sphi 0, %s167
      %s185 = sphi 0, %s185
      %s187 = sphi 0, %s185
      %s188 = sphi 0, %s187
      %s202 = sphi 0, %s188
      %s206 = sphi 0, %s206
      %s208 = sphi 0, %s206
      %s209 = sphi 0, %s208
      %s223 = sphi 0, %s209
      %s229 = sphi 0, %s231
      %s232 = sphi 0, %s229
      %s233 = sphi 0, %s232
      %s249 = sphi 0, %s233
      %s255 = sphi 0, %s257
      %s258 = sphi 0, %s255
      %s259 = sphi 0, %s258
      %s275 = sphi 0, %s259
    $region4: #{tpu_custom_call.1} parent=1 // loop_header_branch
      %23 = sbr.rel (%p21) target = $region8
    $region5: #{tpu_custom_call.1} parent=1 // loop_body
      %s25 = ssub.s32 %s20, 1
      %s26 = ssub.s32 %s20, 2
      %s27 = sadd.s32 %s20, 1
      %s28 = ssub.s32 %s20, %s27
      %p29 = scmp.eq.s32.totalorder %s28, 0
      %s31 = sadd.s32 %s30, 1
      %s32 = scalar_select %p29, %s30, %s31
      %p35 = pneg %p29
      %p36 = scmp.eq.s32.totalorder %s20, 1
      %p37 = por %p35, %p36
      %p38 = scmp.ne.s32.totalorder %s30, %s33
      %p39 = scmp.eq.s32.totalorder %s20, 0
      %p40 = por %p38, %p39
      %p41 = scmp.ne.s32.totalorder %s30, %s33
      %p42 = scmp.eq.s32.totalorder %s25, 1
      %p43 = por %p41, %p42
      %p44 = scmp.ne.s32.totalorder %s33, %s34
      %p45 = scmp.eq.s32.totalorder %s25, 0
      %p46 = por %p44, %p45
      %p47 = scmp.ne.s32.totalorder %s33, %s34
      %p48 = scmp.eq.s32.totalorder %s26, 1
      %p49 = por %p47, %p48
      %p51 = scmp.ne.s32.totalorder %s34, %s50
      %p52 = scmp.eq.s32.totalorder %s26, 0
      %p53 = por %p51, %p52
      %s54 = ssub.s32 %s20, %s27
      %p55 = scmp.eq.s32.totalorder %s54, 0
      %s57 = sadd.s32 %s56, 1
      %s58 = scalar_select %p55, %s56, %s57
      %p61 = pneg %p55
      %p62 = scmp.eq.s32.totalorder %s20, 1
      %p63 = por %p61, %p62
      %p64 = scmp.ne.s32.totalorder %s56, %s59
      %p65 = scmp.eq.s32.totalorder %s20, 0
      %p66 = por %p64, %p65
      %p67 = scmp.ne.s32.totalorder %s56, %s59
      %p68 = scmp.eq.s32.totalorder %s25, 1
      %p69 = por %p67, %p68
      %p70 = scmp.ne.s32.totalorder %s59, %s60
      %p71 = scmp.eq.s32.totalorder %s25, 0
      %p72 = por %p70, %p71
      %p73 = scmp.ne.s32.totalorder %s59, %s60
      %p74 = scmp.eq.s32.totalorder %s26, 1
      %p75 = por %p73, %p74
      %p77 = scmp.ne.s32.totalorder %s60, %s76
      %p78 = scmp.eq.s32.totalorder %s26, 0
      %p79 = por %p77, %p78
      %s81 = sadd.s32 %s80, 1
      %p84 = scmp.eq.s32.totalorder %s20, 1
      %p85 = scmp.ne.s32.totalorder %s80, %s82
      %p86 = scmp.eq.s32.totalorder %s20, 0
      %p87 = por %p85, %p86
      %p88 = scmp.ne.s32.totalorder %s80, %s82
      %p89 = scmp.eq.s32.totalorder %s25, 1
      %p90 = por %p88, %p89
      %p91 = scmp.ne.s32.totalorder %s82, %s83
      %p92 = scmp.eq.s32.totalorder %s25, 0
      %p93 = por %p91, %p92
      %p94 = scmp.ne.s32.totalorder %s82, %s83
      %p95 = scmp.eq.s32.totalorder %s26, 1
      %p96 = por %p94, %p95
      %p98 = scmp.ne.s32.totalorder %s83, %s97
      %p99 = scmp.eq.s32.totalorder %s26, 0
      %p100 = por %p98, %p99
      %s102 = sadd.s32 %s101, 1
      %p105 = scmp.eq.s32.totalorder %s20, 1
      %p106 = scmp.ne.s32.totalorder %s101, %s103
      %p107 = scmp.eq.s32.totalorder %s20, 0
      %p108 = por %p106, %p107
      %p109 = scmp.ne.s32.totalorder %s101, %s103
      %p110 = scmp.eq.s32.totalorder %s25, 1
      %p111 = por %p109, %p110
      %p112 = scmp.ne.s32.totalorder %s103, %s104
      %p113 = scmp.eq.s32.totalorder %s25, 0
      %p114 = por %p112, %p113
      %p115 = scmp.ne.s32.totalorder %s103, %s104
      %p116 = scmp.eq.s32.totalorder %s26, 1
      %p117 = por %p115, %p116
      %p119 = scmp.ne.s32.totalorder %s104, %s118
      %p120 = scmp.eq.s32.totalorder %s26, 0
      %p121 = por %p119, %p120
      %s123 = sadd.s32 %s122, 1
      %p126 = scmp.eq.s32.totalorder %s20, 1
      %p127 = scmp.ne.s32.totalorder %s122, %s124
      %p128 = scmp.eq.s32.totalorder %s20, 0
      %p129 = por %p127, %p128
      %p130 = scmp.ne.s32.totalorder %s122, %s124
      %p131 = scmp.eq.s32.totalorder %s25, 1
      %p132 = por %p130, %p131
      %p133 = scmp.ne.s32.totalorder %s124, %s125
      %p134 = scmp.eq.s32.totalorder %s25, 0
      %p135 = por %p133, %p134
      %p136 = scmp.ne.s32.totalorder %s124, %s125
      %p137 = scmp.eq.s32.totalorder %s26, 1
      %p138 = por %p136, %p137
      %p140 = scmp.ne.s32.totalorder %s125, %s139
      %p141 = scmp.eq.s32.totalorder %s26, 0
      %p142 = por %p140, %p141
      %s144 = sadd.s32 %s143, 1
      %p147 = scmp.eq.s32.totalorder %s20, 1
      %p148 = scmp.ne.s32.totalorder %s143, %s145
      %p149 = scmp.eq.s32.totalorder %s20, 0
      %p150 = por %p148, %p149
      %p151 = scmp.ne.s32.totalorder %s143, %s145
      %p152 = scmp.eq.s32.totalorder %s25, 1
      %p153 = por %p151, %p152
      %p154 = scmp.ne.s32.totalorder %s145, %s146
      %p155 = scmp.eq.s32.totalorder %s25, 0
      %p156 = por %p154, %p155
      %p157 = scmp.ne.s32.totalorder %s145, %s146
      %p158 = scmp.eq.s32.totalorder %s26, 1
      %p159 = por %p157, %p158
      %p161 = scmp.ne.s32.totalorder %s146, %s160
      %p162 = scmp.eq.s32.totalorder %s26, 0
      %p163 = por %p161, %p162
      %s165 = sadd.s32 %s164, 1
      %p168 = scmp.eq.s32.totalorder %s20, 1
      %p169 = scmp.ne.s32.totalorder %s164, %s166
      %p170 = scmp.eq.s32.totalorder %s20, 0
      %p171 = por %p169, %p170
      %p172 = scmp.ne.s32.totalorder %s164, %s166
      %p173 = scmp.eq.s32.totalorder %s25, 1
      %p174 = por %p172, %p173
      %p175 = scmp.ne.s32.totalorder %s166, %s167
      %p176 = scmp.eq.s32.totalorder %s25, 0
      %p177 = por %p175, %p176
      %p178 = scmp.ne.s32.totalorder %s166, %s167
      %p179 = scmp.eq.s32.totalorder %s26, 1
      %p180 = por %p178, %p179
      %p182 = scmp.ne.s32.totalorder %s167, %s181
      %p183 = scmp.eq.s32.totalorder %s26, 0
      %p184 = por %p182, %p183
      %s186 = sadd.s32 %s185, 1
      %p189 = scmp.eq.s32.totalorder %s20, 1
      %p190 = scmp.ne.s32.totalorder %s185, %s187
      %p191 = scmp.eq.s32.totalorder %s20, 0
      %p192 = por %p190, %p191
      %p193 = scmp.ne.s32.totalorder %s185, %s187
      %p194 = scmp.eq.s32.totalorder %s25, 1
      %p195 = por %p193, %p194
      %p196 = scmp.ne.s32.totalorder %s187, %s188
      %p197 = scmp.eq.s32.totalorder %s25, 0
      %p198 = por %p196, %p197
      %p199 = scmp.ne.s32.totalorder %s187, %s188
      %p200 = scmp.eq.s32.totalorder %s26, 1
      %p201 = por %p199, %p200
      %p203 = scmp.ne.s32.totalorder %s188, %s202
      %p204 = scmp.eq.s32.totalorder %s26, 0
      %p205 = por %p203, %p204
      %s207 = sadd.s32 %s206, 1
      %p210 = scmp.eq.s32.totalorder %s20, 1
      %p211 = scmp.ne.s32.totalorder %s206, %s208
      %p212 = scmp.eq.s32.totalorder %s20, 0
      %p213 = por %p211, %p212
      %p214 = scmp.ne.s32.totalorder %s206, %s208
      %p215 = scmp.eq.s32.totalorder %s25, 1
      %p216 = por %p214, %p215
      %p217 = scmp.ne.s32.totalorder %s208, %s209
      %p218 = scmp.eq.s32.totalorder %s25, 0
      %p219 = por %p217, %p218
      %p220 = scmp.ne.s32.totalorder %s208, %s209
      %p221 = scmp.eq.s32.totalorder %s26, 1
      %p222 = por %p220, %p221
      %p224 = scmp.ne.s32.totalorder %s209, %s223
      %p225 = scmp.eq.s32.totalorder %s26, 0
      %p226 = por %p224, %p225
      %s227 = ssub.s32 %s20, %s27
      %p228 = scmp.eq.s32.totalorder %s227, 0
      %s230 = sadd.s32 %s229, 1
      %s231 = scalar_select %p228, %s229, %s230
      %p234 = pneg %p228
      %p235 = scmp.eq.s32.totalorder %s20, 1
      %p236 = por %p234, %p235
      %p237 = scmp.ne.s32.totalorder %s229, %s232
      %p238 = scmp.eq.s32.totalorder %s20, 0
      %p239 = por %p237, %p238
      %p240 = scmp.ne.s32.totalorder %s229, %s232
      %p241 = scmp.eq.s32.totalorder %s25, 1
      %p242 = por %p240, %p241
      %p243 = scmp.ne.s32.totalorder %s232, %s233
      %p244 = scmp.eq.s32.totalorder %s25, 0
      %p245 = por %p243, %p244
      %p246 = scmp.ne.s32.totalorder %s232, %s233
      %p247 = scmp.eq.s32.totalorder %s26, 1
      %p248 = por %p246, %p247
      %p250 = scmp.ne.s32.totalorder %s233, %s249
      %p251 = scmp.eq.s32.totalorder %s26, 0
      %p252 = por %p250, %p251
      %s253 = ssub.s32 %s20, %s27
      %p254 = scmp.eq.s32.totalorder %s253, 0
      %s256 = sadd.s32 %s255, 1
      %s257 = scalar_select %p254, %s255, %s256
      %p260 = pneg %p254
      %p261 = scmp.eq.s32.totalorder %s20, 1
      %p262 = por %p260, %p261
      %p263 = scmp.ne.s32.totalorder %s255, %s258
      %p264 = scmp.eq.s32.totalorder %s20, 0
      %p265 = por %p263, %p264
      %p266 = scmp.ne.s32.totalorder %s255, %s258
      %p267 = scmp.eq.s32.totalorder %s25, 1
      %p268 = por %p266, %p267
      %p269 = scmp.ne.s32.totalorder %s258, %s259
      %p270 = scmp.eq.s32.totalorder %s25, 0
      %p271 = por %p269, %p270
      %p272 = scmp.ne.s32.totalorder %s258, %s259
      %p273 = scmp.eq.s32.totalorder %s26, 1
      %p274 = por %p272, %p273
      %p276 = scmp.ne.s32.totalorder %s259, %s275
      %p277 = scmp.eq.s32.totalorder %s26, 0
      %p278 = por %p276, %p277
      %p279 = scmp.le.s32.totalorder 1, %s20
      %p280 = scmp.lt.s32.totalorder %s20, 3
      %p281 = pnand %p279, %p280
      %p282 = pneg %p281
      // Predicated region
      $region9: #{tpu_custom_call.1} parent=5 // pred_check
        _
      $region10: #{tpu_custom_call.1} parent=5 // pred_check_branch
        %284 = sbr.rel (%p281) target = $region12
      $region11: #{tpu_custom_call.1} parent=5 // pred_region
        %s285 = ssub.s32 %s20, 1
        // Predicated region
        $region13: #{tpu_custom_call.1} parent=11 // pred_check
          %p286 = pneg %p93
        $region14: #{tpu_custom_call.1} parent=11 // pred_check_branch
          %288 = sbr.rel (%p286) target = $region16
        $region15: #{tpu_custom_call.1} parent=11 // pred_region
          _
        $region16: #{tpu_custom_call.1} parent=11 // pred_fallthru
          _
        // Predicated region
        $region17: #{tpu_custom_call.1} parent=11 // pred_check
          %p289 = pneg %p114
        $region18: #{tpu_custom_call.1} parent=11 // pred_check_branch
          %291 = sbr.rel (%p289) target = $region20
        $region19: #{tpu_custom_call.1} parent=11 // pred_region
          _
        $region20: #{tpu_custom_call.1} parent=11 // pred_fallthru
          _
        // Predicated region
        $region21: #{tpu_custom_call.1} parent=11 // pred_check
          %p292 = pneg %p135
        $region22: #{tpu_custom_call.1} parent=11 // pred_check_branch
          %294 = sbr.rel (%p292) target = $region24
        $region23: #{tpu_custom_call.1} parent=11 // pred_region
          _
        $region24: #{tpu_custom_call.1} parent=11 // pred_fallthru
          _
        // Predicated region
        $region25: #{tpu_custom_call.1} parent=11 // pred_check
          %p295 = pneg %p156
        $region26: #{tpu_custom_call.1} parent=11 // pred_check_branch
          %297 = sbr.rel (%p295) target = $region28
        $region27: #{tpu_custom_call.1} parent=11 // pred_region
          _
        $region28: #{tpu_custom_call.1} parent=11 // pred_fallthru
          _
        // Predicated region
        $region29: #{tpu_custom_call.1} parent=11 // pred_check
          %p298 = pneg %p177
        $region30: #{tpu_custom_call.1} parent=11 // pred_check_branch
          %300 = sbr.rel (%p298) target = $region32
        $region31: #{tpu_custom_call.1} parent=11 // pred_region
          _
        $region32: #{tpu_custom_call.1} parent=11 // pred_fallthru
          _
        // Predicated region
        $region33: #{tpu_custom_call.1} parent=11 // pred_check
          %p301 = pneg %p198
        $region34: #{tpu_custom_call.1} parent=11 // pred_check_branch
          %303 = sbr.rel (%p301) target = $region36
        $region35: #{tpu_custom_call.1} parent=11 // pred_region
          _
        $region36: #{tpu_custom_call.1} parent=11 // pred_fallthru
          _
        // Predicated region
        $region37: #{tpu_custom_call.1} parent=11 // pred_check
          %p304 = pneg %p219
        $region38: #{tpu_custom_call.1} parent=11 // pred_check_branch
          %306 = sbr.rel (%p304) target = $region40
        $region39: #{tpu_custom_call.1} parent=11 // pred_region
          _
        $region40: #{tpu_custom_call.1} parent=11 // pred_fallthru
          _
      $region12: #{tpu_custom_call.1} parent=5 // pred_fallthru
        _
      %p307 = scmp.lt.s32.totalorder %s20, 2
      // Predicated region
      $region41: #{tpu_custom_call.1} parent=5 // pred_check
        %p308 = pneg %p307
      $region42: #{tpu_custom_call.1} parent=5 // pred_check_branch
        %310 = sbr.rel (%p308) target = $region44
      $region43: #{tpu_custom_call.1} parent=5 // pred_region
        // Predicated region
        $region45: #{tpu_custom_call.1} parent=43 // pred_check
          %p311 = pneg %p40
        $region46: #{tpu_custom_call.1} parent=43 // pred_check_branch
          %313 = sbr.rel (%p311) target = $region48
        $region47: #{tpu_custom_call.1} parent=43 // pred_region
          %s314 = smul.u32 16, %s20
          %p315 = scmp.lt.s32.totalorder %s314, 31
          %s316 = scalar_select %p315, %s314, 31
          %s317 = smul.addr %s316, 8
          %s318 = scalar_lea.vmem %s0, %s317
          %s319 = smul.u32 16, %s20
        $region48: #{tpu_custom_call.1} parent=43 // pred_fallthru
          _
        // Predicated region
        $region49: #{tpu_custom_call.1} parent=43 // pred_check
          %p320 = pneg %p66
        $region50: #{tpu_custom_call.1} parent=43 // pred_check_branch
          %322 = sbr.rel (%p320) target = $region52
        $region51: #{tpu_custom_call.1} parent=43 // pred_region
          %s323 = smul.u32 16, %s20
          %p324 = scmp.lt.s32.totalorder %s323, 31
          %s325 = scalar_select %p324, %s323, 31
          %s326 = smul.addr %s325, 8
          %s327 = scalar_lea.vmem %s1, %s326
          %s328 = smul.u32 16, %s20
        $region52: #{tpu_custom_call.1} parent=43 // pred_fallthru
          _
      $region44: #{tpu_custom_call.1} parent=5 // pred_fallthru
        _
      %p329 = scmp.le.s32.totalorder 1, %s20
      %p330 = scmp.lt.s32.totalorder %s20, 3
      %p331 = pnand %p329, %p330
      %p332 = pneg %p331
      // Predicated region
      $region53: #{tpu_custom_call.1} parent=5 // pred_check
        _
      $region54: #{tpu_custom_call.1} parent=5 // pred_check_branch
        %334 = sbr.rel (%p331) target = $region56
      $region55: #{tpu_custom_call.1} parent=5 // pred_region
        %s335 = ssub.s32 %s20, 1
        %s336 = smul.u32 16, %s25
        %p337 = scmp.lt.s32.totalorder %s336, 31
        %s338 = scalar_select %p337, %s336, 31
        %s339 = smul.addr %s338, 8
        %s340 = scalar_lea.vmem %s0, %s339
        %p341 = pneg %p46
        %p342 = pneg %p43
        %s343 = smul.u32 16, %s25
        %p344 = scmp.lt.s32.totalorder %s343, 31
        %s345 = scalar_select %p344, %s343, 31
        %s346 = smul.addr %s345, 8
        %s347 = scalar_lea.vmem %s1, %s346
        %p348 = pneg %p72
        %p349 = pneg %p69
        %p350 = pneg %p93
        %p351 = pneg %p90
        %p352 = pneg %p114
        %p353 = pneg %p111
        %p354 = pneg %p135
        %p355 = pneg %p132
        %p356 = pneg %p156
        %p357 = pneg %p153
        %p358 = pneg %p177
        %p359 = pneg %p174
        %p360 = pneg %p198
        %p361 = pneg %p195
        %p362 = pneg %p219
        %p363 = pneg %p216
        %p364 = pneg %p245
        %p365 = pneg %p242
        %s366 = smul.u32 16, %s25
        %p367 = scmp.lt.s32.totalorder %s366, 31
        %s368 = scalar_select %p367, %s366, 31
        %s369 = smul.addr %s368, 8
        %s370 = scalar_lea.vmem %s9, %s369
        %p371 = pneg %p271
        %p372 = pneg %p268
        %s373 = sand.u32 %s258, 1
        %s374 = scalar_lea.sflag [#allocation3], %s373
        %s375 = sand.u32 %s258, 1
        %s376 = scalar_lea.vmem [#allocation2], %s375
        %s377 = smul.u32 16, %s25
        %p378 = scmp.lt.s32.totalorder %s377, 31
        %s379 = scalar_select %p378, %s377, 31
        %s380 = smul.addr %s379, 8
        %s381 = scalar_lea.vmem %s0, %s380
        %s382 = smul.u32 16, %s25
        %s383 = smul.u32 16, %s25
        %p384 = scmp.lt.s32.totalorder %s383, 31
        %s385 = scalar_select %p384, %s383, 31
        %s386 = smul.addr %s385, 8
        %s387 = scalar_lea.vmem %s1, %s386
        %s388 = smul.u32 16, %s25
        %s389 = smul.u32 16, %s25
        %p390 = scmp.lt.s32.totalorder %s389, 31
        %s391 = scalar_select %p390, %s389, 31
        %s392 = smul.addr %s391, 8
        %s393 = scalar_lea.vmem %s9, %s392
        %s394 = smul.u32 16, %s25
        %v395 = vld [vmem:[%s381] sm:$0xff]
        %v396 = vld [vmem:[%s381 + $0x8] sm:$0xff]
        %v397 = vld [vmem:[%s381 + $0x10] sm:$0xff]
        %v398 = vld [vmem:[%s381 + $0x18] sm:$0xff]
        %v399 = vld [vmem:[%s381 + $0x20] sm:$0xff]
        %v400 = vld [vmem:[%s381 + $0x28] sm:$0xff]
        %v401 = vld [vmem:[%s381 + $0x30] sm:$0xff]
        %v402 = vld [vmem:[%s381 + $0x38] sm:$0xff]
        %v403 = vld [vmem:[%s381 + $0x40] sm:$0xff]
        %v404 = vld [vmem:[%s381 + $0x48] sm:$0xff]
        %v405 = vld [vmem:[%s381 + $0x50] sm:$0xff]
        %v406 = vld [vmem:[%s381 + $0x58] sm:$0xff]
        %v407 = vld [vmem:[%s381 + $0x60] sm:$0xff]
        %v408 = vld [vmem:[%s381 + $0x68] sm:$0xff]
        %v409 = vld [vmem:[%s381 + $0x70] sm:$0xff]
        %v410 = vld [vmem:[%s381 + $0x78] sm:$0xff]
        %v411 = vld [vmem:[%s2] sm:$0xff]
        %v412 = vld [vmem:[%s2 + $0x8] sm:$0xff]
        %v413 = vld [vmem:[%s2 + $0x10] sm:$0xff]
        %v414 = vld [vmem:[%s3] sm:$0x1]
        %v416 = vlaneseq
        %v417 = vshrl.u32 %v416, 7
        %v418 = vsub.s32 0, %v417
        %v419 = vrot.slane %v414, %v418
        %vm421 = vcmask 195584
        %v423 = vsel %vm421, %v395, 0
        %v426 = vsel %vm421, %v396, 0
        %v429 = vsel %vm421, %v397, 0
        %v432 = vsel %vm421, %v398, 0
        %v435 = vsel %vm421, %v399, 0
        %v438 = vsel %vm421, %v400, 0
        %v441 = vsel %vm421, %v401, 0
        %v444 = vsel %vm421, %v402, 0
        %v447 = vsel %vm421, %v403, 0
        %v450 = vsel %vm421, %v404, 0
        %v453 = vsel %vm421, %v405, 0
        %v456 = vsel %vm421, %v406, 0
        %v459 = vsel %vm421, %v407, 0
        %v462 = vsel %vm421, %v408, 0
        %v465 = vsel %vm421, %v409, 0
        %v468 = vsel %vm421, %v410, 0
        %470 = vmatprep.subr.mxu0 0.0
        %471 = vmatpush1.msra.mxu0 %v411
        %472 = vmatprep.subr.mxu0 0.0
        %473 = vmatpush1.msra.mxu0 %v412
        %474 = vmatprep.subr.mxu0 0.0
        %475 = vmatpush1.msra.mxu0 %v413
        %476 = vmatprep.subr.mxu0 0.0
        %477 = vmatpush1.msra.mxu0 0.0
        %478 = vmatprep.subr.mxu0 0.0
        %479 = vmatpush1.msra.mxu0 0.0
        %480 = vmatprep.subr.mxu0 0.0
        %481 = vmatpush1.msra.mxu0 0.0
        %482 = vmatprep.subr.mxu0 0.0
        %483 = vmatpush1.msra.mxu0 0.0
        %484 = vmatprep.subr.mxu0 0.0
        %485 = vmatpush1.msra.mxu0 0.0
        %486 = vmatprep.subr.mxu0 0.0
        %487 = vmatpush1.msra.mxu0 0.0
        %488 = vmatprep.subr.mxu0 0.0
        %489 = vmatpush1.msra.mxu0 0.0
        %490 = vmatprep.subr.mxu0 0.0
        %491 = vmatpush1.msra.mxu0 0.0
        %492 = vmatprep.subr.mxu0 0.0
        %493 = vmatpush1.msra.mxu0 0.0
        %494 = vmatprep.subr.mxu0 0.0
        %495 = vmatpush1.msra.mxu0 0.0
        %496 = vmatprep.subr.mxu0 0.0
        %497 = vmatpush1.msra.mxu0 0.0
        %498 = vmatprep.subr.mxu0 0.0
        %499 = vmatpush1.msra.mxu0 0.0
        %500 = vmatprep.subr.mxu0 0.0
        %501 = vmatpush1.msra.mxu0 0.0
        %502 = vmatprep.subr.mxu0 0.0
        %503 = vmatpush1.msra.mxu0 0.0
        %504 = vmatprep.subr.mxu0 0.0
        %505 = vmatpush1.msra.mxu0 0.0
        %506 = vmatprep.subr.mxu0 0.0
        %507 = vmatpush1.msra.mxu0 0.0
        %508 = vmatprep.subr.mxu0 0.0
        %509 = vmatpush1.msra.mxu0 0.0
        %510 = vmatprep.subr.mxu0 0.0
        %511 = vmatpush1.msra.mxu0 0.0
        %512 = vmatprep.subr.mxu0 0.0
        %513 = vmatpush1.msra.mxu0 0.0
        %514 = vmatprep.subr.mxu0 0.0
        %515 = vmatpush1.msra.mxu0 0.0
        %516 = vmatprep.subr.mxu0 0.0
        %517 = vmatpush1.msra.mxu0 0.0
        %518 = vmatprep.subr.mxu0 0.0
        %519 = vmatpush1.msra.mxu0 0.0
        %520 = vmatprep.subr.mxu0 0.0
        %521 = vmatpush1.msra.mxu0 0.0
        %522 = vmatprep.subr.mxu0 0.0
        %523 = vmatpush1.msra.mxu0 0.0
        %524 = vmatprep.subr.mxu0 0.0
        %525 = vmatpush1.msra.mxu0 0.0
        %526 = vmatprep.subr.mxu0 0.0
        %527 = vmatpush1.msra.mxu0 0.0
        %528 = vmatprep.subr.mxu0 0.0
        %529 = vmatpush1.msra.mxu0 0.0
        %530 = vmatprep.subr.mxu0 0.0
        %531 = vmatpush1.msra.mxu0 0.0
        %532 = vmatprep.subr.mxu0 0.0
        %533 = vmatpush1.msra.mxu0 0.0
        %534 = vmatprep.mubr.f32.mxu0 0.0
        %535 = vmatmul.mubr.f32.gmra.mrb[0].mxu0 %v423
        %v536 = vpop.f32.mrb[0].mxu0
        %v537 = vadd.f32 %v419, %v536
        %v538 = vpop.f32.mrb[0].mxu0
        %539 = vmatprep.mubr.f32.mxu0 0.0
        %540 = vmatmul.mubr.f32.gmra.mrb[0].mxu0 %v426
        %v541 = vpop.f32.mrb[0].mxu0
        %v542 = vadd.f32 %v419, %v541
        %v543 = vpop.f32.mrb[0].mxu0
        %544 = vmatprep.mubr.f32.mxu0 0.0
        %545 = vmatmul.mubr.f32.gmra.mrb[0].mxu0 %v429
        %v546 = vpop.f32.mrb[0].mxu0
        %v547 = vadd.f32 %v419, %v546
        %v548 = vpop.f32.mrb[0].mxu0
        %549 = vmatprep.mubr.f32.mxu0 0.0
        %550 = vmatmul.mubr.f32.gmra.mrb[0].mxu0 %v432
        %v551 = vpop.f32.mrb[0].mxu0
        %v552 = vadd.f32 %v419, %v551
        %v553 = vpop.f32.mrb[0].mxu0
        %554 = vmatprep.mubr.f32.mxu0 0.0
        %555 = vmatmul.mubr.f32.gmra.mrb[0].mxu0 %v435
        %v556 = vpop.f32.mrb[0].mxu0
        %v557 = vadd.f32 %v419, %v556
        %v558 = vpop.f32.mrb[0].mxu0
        %559 = vmatprep.mubr.f32.mxu0 0.0
        %560 = vmatmul.mubr.f32.gmra.mrb[0].mxu0 %v438
        %v561 = vpop.f32.mrb[0].mxu0
        %v562 = vadd.f32 %v419, %v561
        %v563 = vpop.f32.mrb[0].mxu0
        %564 = vmatprep.mubr.f32.mxu0 0.0
        %565 = vmatmul.mubr.f32.gmra.mrb[0].mxu0 %v441
        %v566 = vpop.f32.mrb[0].mxu0
        %v567 = vadd.f32 %v419, %v566
        %v568 = vpop.f32.mrb[0].mxu0
        %569 = vmatprep.mubr.f32.mxu0 0.0
        %570 = vmatmul.mubr.f32.gmra.mrb[0].mxu0 %v444
        %v571 = vpop.f32.mrb[0].mxu0
        %v572 = vadd.f32 %v419, %v571
        %v573 = vpop.f32.mrb[0].mxu0
        %574 = vmatprep.mubr.f32.mxu0 0.0
        %575 = vmatmul.mubr.f32.gmra.mrb[0].mxu0 %v447
        %v576 = vpop.f32.mrb[0].mxu0
        %v577 = vadd.f32 %v419, %v576
        %v578 = vpop.f32.mrb[0].mxu0
        %579 = vmatprep.mubr.f32.mxu0 0.0
        %580 = vmatmul.mubr.f32.gmra.mrb[0].mxu0 %v450
        %v581 = vpop.f32.mrb[0].mxu0
        %v582 = vadd.f32 %v419, %v581
        %v583 = vpop.f32.mrb[0].mxu0
        %584 = vmatprep.mubr.f32.mxu0 0.0
        %585 = vmatmul.mubr.f32.gmra.mrb[0].mxu0 %v453
        %v586 = vpop.f32.mrb[0].mxu0
        %v587 = vadd.f32 %v419, %v586
        %v588 = vpop.f32.mrb[0].mxu0
        %589 = vmatprep.mubr.f32.mxu0 0.0
        %590 = vmatmul.mubr.f32.gmra.mrb[0].mxu0 %v456
        %v591 = vpop.f32.mrb[0].mxu0
        %v592 = vadd.f32 %v419, %v591
        %v593 = vpop.f32.mrb[0].mxu0
        %594 = vmatprep.mubr.f32.mxu0 0.0
        %595 = vmatmul.mubr.f32.gmra.mrb[0].mxu0 %v459
        %v596 = vpop.f32.mrb[0].mxu0
        %v597 = vadd.f32 %v419, %v596
        %v598 = vpop.f32.mrb[0].mxu0
        %599 = vmatprep.mubr.f32.mxu0 0.0
        %600 = vmatmul.mubr.f32.gmra.mrb[0].mxu0 %v462
        %v601 = vpop.f32.mrb[0].mxu0
        %v602 = vadd.f32 %v419, %v601
        %v603 = vpop.f32.mrb[0].mxu0
        %604 = vmatprep.mubr.f32.mxu0 0.0
        %605 = vmatmul.mubr.f32.gmra.mrb[0].mxu0 %v465
        %v606 = vpop.f32.mrb[0].mxu0
        %v607 = vadd.f32 %v419, %v606
        %v608 = vpop.f32.mrb[0].mxu0
        %609 = vmatprep.mubr.f32.mxu0 0.0
        %610 = vmatmul.mubr.f32.gmra.mrb[0].mxu0 %v468
        %v611 = vpop.f32.mrb[0].mxu0
        %v612 = vadd.f32 %v419, %v611
        %v613 = vpop.f32.mrb[0].mxu0
        %614 = vdwg.mxu0
        %v615 = vmax.f32 %v537, 0.0
        %v616 = vmax.f32 %v542, 0.0
        %v617 = vmax.f32 %v547, 0.0
        %v618 = vmax.f32 %v552, 0.0
        %v619 = vmax.f32 %v557, 0.0
        %v620 = vmax.f32 %v562, 0.0
        %v621 = vmax.f32 %v567, 0.0
        %v622 = vmax.f32 %v572, 0.0
        %v623 = vmax.f32 %v577, 0.0
        %v624 = vmax.f32 %v582, 0.0
        %v625 = vmax.f32 %v587, 0.0
        %v626 = vmax.f32 %v592, 0.0
        %v627 = vmax.f32 %v597, 0.0
        %v628 = vmax.f32 %v602, 0.0
        %v629 = vmax.f32 %v607, 0.0
        %v630 = vmax.f32 %v612, 0.0
        %v631 = vld [vmem:[%s4] sm:$0xff]
        %v632 = vld [vmem:[%s4 + $0x8] sm:$0xff]
        %v633 = vld [vmem:[%s4 + $0x10] sm:$0xff]
        %v634 = vld [vmem:[%s4 + $0x18] sm:$0xff]
        %v635 = vld [vmem:[%s5] sm:$0x1]
        %v637 = vlaneseq
        %v638 = vshrl.u32 %v637, 7
        %v639 = vsub.s32 0, %v638
        %v640 = vrot.slane %v635, %v639
        %vm642 = vcmask 261120
        %v644 = vsel %vm642, %v615, 0
        %v647 = vsel %vm642, %v616, 0
        %v650 = vsel %vm642, %v617, 0
        %v653 = vsel %vm642, %v618, 0
        %v656 = vsel %vm642, %v619, 0
        %v659 = vsel %vm642, %v620, 0
        %v662 = vsel %vm642, %v621, 0
        %v665 = vsel %vm642, %v622, 0
        %v668 = vsel %vm642, %v623, 0
        %v671 = vsel %vm642, %v624, 0
        %v674 = vsel %vm642, %v625, 0
        %v677 = vsel %vm642, %v626, 0
        %v680 = vsel %vm642, %v627, 0
        %v683 = vsel %vm642, %v628, 0
        %v686 = vsel %vm642, %v629, 0
        %v689 = vsel %vm642, %v630, 0
        %691 = vmatprep.subr.mxu0 0.0
        %692 = vmatpush1.msra.mxu0 %v631
        %693 = vmatprep.subr.mxu0 0.0
        %694 = vmatpush1.msra.mxu0 %v632
        %695 = vmatprep.subr.mxu0 0.0
        %696 = vmatpush1.msra.mxu0 %v633
        %697 = vmatprep.subr.mxu0 0.0
        %698 = vmatpush1.msra.mxu0 %v634
        %699 = vmatprep.subr.mxu0 0.0
        %700 = vmatpush1.msra.mxu0 0.0
        %701 = vmatprep.subr.mxu0 0.0
        %702 = vmatpush1.msra.mxu0 0.0
        %703 = vmatprep.subr.mxu0 0.0
        %704 = vmatpush1.msra.mxu0 0.0
        %705 = vmatprep.subr.mxu0 0.0
        %706 = vmatpush1.msra.mxu0 0.0
        %707 = vmatprep.subr.mxu0 0.0
        %708 = vmatpush1.msra.mxu0 0.0
        %709 = vmatprep.subr.mxu0 0.0
        %710 = vmatpush1.msra.mxu0 0.0
        %711 = vmatprep.subr.mxu0 0.0
        %712 = vmatpush1.msra.mxu0 0.0
        %713 = vmatprep.subr.mxu0 0.0
        %714 = vmatpush1.msra.mxu0 0.0
        %715 = vmatprep.subr.mxu0 0.0
        %716 = vmatpush1.msra.mxu0 0.0
        %717 = vmatprep.subr.mxu0 0.0
        %718 = vmatpush1.msra.mxu0 0.0
        %719 = vmatprep.subr.mxu0 0.0
        %720 = vmatpush1.msra.mxu0 0.0
        %721 = vmatprep.subr.mxu0 0.0
        %722 = vmatpush1.msra.mxu0 0.0
        %723 = vmatprep.subr.mxu0 0.0
        %724 = vmatpush1.msra.mxu0 0.0
        %725 = vmatprep.subr.mxu0 0.0
        %726 = vmatpush1.msra.mxu0 0.0
        %727 = vmatprep.subr.mxu0 0.0
        %728 = vmatpush1.msra.mxu0 0.0
        %729 = vmatprep.subr.mxu0 0.0
        %730 = vmatpush1.msra.mxu0 0.0
        %731 = vmatprep.subr.mxu0 0.0
        %732 = vmatpush1.msra.mxu0 0.0
        %733 = vmatprep.subr.mxu0 0.0
        %734 = vmatpush1.msra.mxu0 0.0
        %735 = vmatprep.subr.mxu0 0.0
        %736 = vmatpush1.msra.mxu0 0.0
        %737 = vmatprep.subr.mxu0 0.0
        %738 = vmatpush1.msra.mxu0 0.0
        %739 = vmatprep.subr.mxu0 0.0
        %740 = vmatpush1.msra.mxu0 0.0
        %741 = vmatprep.subr.mxu0 0.0
        %742 = vmatpush1.msra.mxu0 0.0
        %743 = vmatprep.subr.mxu0 0.0
        %744 = vmatpush1.msra.mxu0 0.0
        %745 = vmatprep.subr.mxu0 0.0
        %746 = vmatpush1.msra.mxu0 0.0
        %747 = vmatprep.subr.mxu0 0.0
        %748 = vmatpush1.msra.mxu0 0.0
        %749 = vmatprep.subr.mxu0 0.0
        %750 = vmatpush1.msra.mxu0 0.0
        %751 = vmatprep.subr.mxu0 0.0
        %752 = vmatpush1.msra.mxu0 0.0
        %753 = vmatprep.subr.mxu0 0.0
        %754 = vmatpush1.msra.mxu0 0.0
        %755 = vmatprep.mubr.f32.mxu0 0.0
        %756 = vmatmul.mubr.f32.gmra.mrb[0].mxu0 %v644
        %v757 = vpop.f32.mrb[0].mxu0
        %v758 = vadd.f32 %v640, %v757
        %v759 = vpop.f32.mrb[0].mxu0
        %760 = vmatprep.mubr.f32.mxu0 0.0
        %761 = vmatmul.mubr.f32.gmra.mrb[0].mxu0 %v647
        %v762 = vpop.f32.mrb[0].mxu0
        %v763 = vadd.f32 %v640, %v762
        %v764 = vpop.f32.mrb[0].mxu0
        %765 = vmatprep.mubr.f32.mxu0 0.0
        %766 = vmatmul.mubr.f32.gmra.mrb[0].mxu0 %v650
        %v767 = vpop.f32.mrb[0].mxu0
        %v768 = vadd.f32 %v640, %v767
        %v769 = vpop.f32.mrb[0].mxu0
        %770 = vmatprep.mubr.f32.mxu0 0.0
        %771 = vmatmul.mubr.f32.gmra.mrb[0].mxu0 %v653
        %v772 = vpop.f32.mrb[0].mxu0
        %v773 = vadd.f32 %v640, %v772
        %v774 = vpop.f32.mrb[0].mxu0
        %775 = vmatprep.mubr.f32.mxu0 0.0
        %776 = vmatmul.mubr.f32.gmra.mrb[0].mxu0 %v656
        %v777 = vpop.f32.mrb[0].mxu0
        %v778 = vadd.f32 %v640, %v777
        %v779 = vpop.f32.mrb[0].mxu0
        %780 = vmatprep.mubr.f32.mxu0 0.0
        %781 = vmatmul.mubr.f32.gmra.mrb[0].mxu0 %v659
        %v782 = vpop.f32.mrb[0].mxu0
        %v783 = vadd.f32 %v640, %v782
        %v784 = vpop.f32.mrb[0].mxu0
        %785 = vmatprep.mubr.f32.mxu0 0.0
        %786 = vmatmul.mubr.f32.gmra.mrb[0].mxu0 %v662
        %v787 = vpop.f32.mrb[0].mxu0
        %v788 = vadd.f32 %v640, %v787
        %v789 = vpop.f32.mrb[0].mxu0
        %790 = vmatprep.mubr.f32.mxu0 0.0
        %791 = vmatmul.mubr.f32.gmra.mrb[0].mxu0 %v665
        %v792 = vpop.f32.mrb[0].mxu0
        %v793 = vadd.f32 %v640, %v792
        %v794 = vpop.f32.mrb[0].mxu0
        %795 = vmatprep.mubr.f32.mxu0 0.0
        %796 = vmatmul.mubr.f32.gmra.mrb[0].mxu0 %v668
        %v797 = vpop.f32.mrb[0].mxu0
        %v798 = vadd.f32 %v640, %v797
        %v799 = vpop.f32.mrb[0].mxu0
        %800 = vmatprep.mubr.f32.mxu0 0.0
        %801 = vmatmul.mubr.f32.gmra.mrb[0].mxu0 %v671
        %v802 = vpop.f32.mrb[0].mxu0
        %v803 = vadd.f32 %v640, %v802
        %v804 = vpop.f32.mrb[0].mxu0
        %805 = vmatprep.mubr.f32.mxu0 0.0
        %806 = vmatmul.mubr.f32.gmra.mrb[0].mxu0 %v674
        %v807 = vpop.f32.mrb[0].mxu0
        %v808 = vadd.f32 %v640, %v807
        %v809 = vpop.f32.mrb[0].mxu0
        %810 = vmatprep.mubr.f32.mxu0 0.0
        %811 = vmatmul.mubr.f32.gmra.mrb[0].mxu0 %v677
        %v812 = vpop.f32.mrb[0].mxu0
        %v813 = vadd.f32 %v640, %v812
        %v814 = vpop.f32.mrb[0].mxu0
        %815 = vmatprep.mubr.f32.mxu0 0.0
        %816 = vmatmul.mubr.f32.gmra.mrb[0].mxu0 %v680
        %v817 = vpop.f32.mrb[0].mxu0
        %v818 = vadd.f32 %v640, %v817
        %v819 = vpop.f32.mrb[0].mxu0
        %820 = vmatprep.mubr.f32.mxu0 0.0
        %821 = vmatmul.mubr.f32.gmra.mrb[0].mxu0 %v683
        %v822 = vpop.f32.mrb[0].mxu0
        %v823 = vadd.f32 %v640, %v822
        %v824 = vpop.f32.mrb[0].mxu0
        %825 = vmatprep.mubr.f32.mxu0 0.0
        %826 = vmatmul.mubr.f32.gmra.mrb[0].mxu0 %v686
        %v827 = vpop.f32.mrb[0].mxu0
        %v828 = vadd.f32 %v640, %v827
        %v829 = vpop.f32.mrb[0].mxu0
        %830 = vmatprep.mubr.f32.mxu0 0.0
        %831 = vmatmul.mubr.f32.gmra.mrb[0].mxu0 %v689
        %v832 = vpop.f32.mrb[0].mxu0
        %v833 = vadd.f32 %v640, %v832
        %v834 = vpop.f32.mrb[0].mxu0
        %835 = vdwg.mxu0
        %v836 = vmax.f32 %v758, 0.0
        %v837 = vmax.f32 %v763, 0.0
        %v838 = vmax.f32 %v768, 0.0
        %v839 = vmax.f32 %v773, 0.0
        %v840 = vmax.f32 %v778, 0.0
        %v841 = vmax.f32 %v783, 0.0
        %v842 = vmax.f32 %v788, 0.0
        %v843 = vmax.f32 %v793, 0.0
        %v844 = vmax.f32 %v798, 0.0
        %v845 = vmax.f32 %v803, 0.0
        %v846 = vmax.f32 %v808, 0.0
        %v847 = vmax.f32 %v813, 0.0
        %v848 = vmax.f32 %v818, 0.0
        %v849 = vmax.f32 %v823, 0.0
        %v850 = vmax.f32 %v828, 0.0
        %v851 = vmax.f32 %v833, 0.0
        %v852 = vld [vmem:[%s6] sm:$0xff]
        %v853 = vld [vmem:[%s6 + $0x8] sm:$0xff]
        %v854 = vld [vmem:[%s6 + $0x10] sm:$0xff]
        %v855 = vld [vmem:[%s6 + $0x18] sm:$0xff]
        %v856 = vld [vmem:[%s7] sm:$0x1]
        %v858 = vlaneseq
        %v859 = vshrl.u32 %v858, 7
        %v860 = vsub.s32 0, %v859
        %v861 = vrot.slane %v856, %v860
        %v864 = vsel %vm642, %v836, 0
        %v867 = vsel %vm642, %v837, 0
        %v870 = vsel %vm642, %v838, 0
        %v873 = vsel %vm642, %v839, 0
        %v876 = vsel %vm642, %v840, 0
        %v879 = vsel %vm642, %v841, 0
        %v882 = vsel %vm642, %v842, 0
        %v885 = vsel %vm642, %v843, 0
        %v888 = vsel %vm642, %v844, 0
        %v891 = vsel %vm642, %v845, 0
        %v894 = vsel %vm642, %v846, 0
        %v897 = vsel %vm642, %v847, 0
        %v900 = vsel %vm642, %v848, 0
        %v903 = vsel %vm642, %v849, 0
        %v906 = vsel %vm642, %v850, 0
        %v909 = vsel %vm642, %v851, 0
        %911 = vmatprep.subr.mxu0 0.0
        %912 = vmatpush1.msra.mxu0 %v852
        %913 = vmatprep.subr.mxu0 0.0
        %914 = vmatpush1.msra.mxu0 %v853
        %915 = vmatprep.subr.mxu0 0.0
        %916 = vmatpush1.msra.mxu0 %v854
        %917 = vmatprep.subr.mxu0 0.0
        %918 = vmatpush1.msra.mxu0 %v855
        %919 = vmatprep.subr.mxu0 0.0
        %920 = vmatpush1.msra.mxu0 0.0
        %921 = vmatprep.subr.mxu0 0.0
        %922 = vmatpush1.msra.mxu0 0.0
        %923 = vmatprep.subr.mxu0 0.0
        %924 = vmatpush1.msra.mxu0 0.0
        %925 = vmatprep.subr.mxu0 0.0
        %926 = vmatpush1.msra.mxu0 0.0
        %927 = vmatprep.subr.mxu0 0.0
        %928 = vmatpush1.msra.mxu0 0.0
        %929 = vmatprep.subr.mxu0 0.0
        %930 = vmatpush1.msra.mxu0 0.0
        %931 = vmatprep.subr.mxu0 0.0
        %932 = vmatpush1.msra.mxu0 0.0
        %933 = vmatprep.subr.mxu0 0.0
        %934 = vmatpush1.msra.mxu0 0.0
        %935 = vmatprep.subr.mxu0 0.0
        %936 = vmatpush1.msra.mxu0 0.0
        %937 = vmatprep.subr.mxu0 0.0
        %938 = vmatpush1.msra.mxu0 0.0
        %939 = vmatprep.subr.mxu0 0.0
        %940 = vmatpush1.msra.mxu0 0.0
        %941 = vmatprep.subr.mxu0 0.0
        %942 = vmatpush1.msra.mxu0 0.0
        %943 = vmatprep.subr.mxu0 0.0
        %944 = vmatpush1.msra.mxu0 0.0
        %945 = vmatprep.subr.mxu0 0.0
        %946 = vmatpush1.msra.mxu0 0.0
        %947 = vmatprep.subr.mxu0 0.0
        %948 = vmatpush1.msra.mxu0 0.0
        %949 = vmatprep.subr.mxu0 0.0
        %950 = vmatpush1.msra.mxu0 0.0
        %951 = vmatprep.subr.mxu0 0.0
        %952 = vmatpush1.msra.mxu0 0.0
        %953 = vmatprep.subr.mxu0 0.0
        %954 = vmatpush1.msra.mxu0 0.0
        %955 = vmatprep.subr.mxu0 0.0
        %956 = vmatpush1.msra.mxu0 0.0
        %957 = vmatprep.subr.mxu0 0.0
        %958 = vmatpush1.msra.mxu0 0.0
        %959 = vmatprep.subr.mxu0 0.0
        %960 = vmatpush1.msra.mxu0 0.0
        %961 = vmatprep.subr.mxu0 0.0
        %962 = vmatpush1.msra.mxu0 0.0
        %963 = vmatprep.subr.mxu0 0.0
        %964 = vmatpush1.msra.mxu0 0.0
        %965 = vmatprep.subr.mxu0 0.0
        %966 = vmatpush1.msra.mxu0 0.0
        %967 = vmatprep.subr.mxu0 0.0
        %968 = vmatpush1.msra.mxu0 0.0
        %969 = vmatprep.subr.mxu0 0.0
        %970 = vmatpush1.msra.mxu0 0.0
        %971 = vmatprep.subr.mxu0 0.0
        %972 = vmatpush1.msra.mxu0 0.0
        %973 = vmatprep.subr.mxu0 0.0
        %974 = vmatpush1.msra.mxu0 0.0
        %975 = vmatprep.mubr.f32.mxu0 0.0
        %976 = vmatmul.mubr.f32.gmra.mrb[0].mxu0 %v864
        %v977 = vpop.f32.mrb[0].mxu0
        %v978 = vadd.f32 %v861, %v977
        %v979 = vpop.f32.mrb[0].mxu0
        %980 = vmatprep.mubr.f32.mxu0 0.0
        %981 = vmatmul.mubr.f32.gmra.mrb[0].mxu0 %v867
        %v982 = vpop.f32.mrb[0].mxu0
        %v983 = vadd.f32 %v861, %v982
        %v984 = vpop.f32.mrb[0].mxu0
        %985 = vmatprep.mubr.f32.mxu0 0.0
        %986 = vmatmul.mubr.f32.gmra.mrb[0].mxu0 %v870
        %v987 = vpop.f32.mrb[0].mxu0
        %v988 = vadd.f32 %v861, %v987
        %v989 = vpop.f32.mrb[0].mxu0
        %990 = vmatprep.mubr.f32.mxu0 0.0
        %991 = vmatmul.mubr.f32.gmra.mrb[0].mxu0 %v873
        %v992 = vpop.f32.mrb[0].mxu0
        %v993 = vadd.f32 %v861, %v992
        %v994 = vpop.f32.mrb[0].mxu0
        %995 = vmatprep.mubr.f32.mxu0 0.0
        %996 = vmatmul.mubr.f32.gmra.mrb[0].mxu0 %v876
        %v997 = vpop.f32.mrb[0].mxu0
        %v998 = vadd.f32 %v861, %v997
        %v999 = vpop.f32.mrb[0].mxu0
        %1000 = vmatprep.mubr.f32.mxu0 0.0
        %1001 = vmatmul.mubr.f32.gmra.mrb[0].mxu0 %v879
        %v1002 = vpop.f32.mrb[0].mxu0
        %v1003 = vadd.f32 %v861, %v1002
        %v1004 = vpop.f32.mrb[0].mxu0
        %1005 = vmatprep.mubr.f32.mxu0 0.0
        %1006 = vmatmul.mubr.f32.gmra.mrb[0].mxu0 %v882
        %v1007 = vpop.f32.mrb[0].mxu0
        %v1008 = vadd.f32 %v861, %v1007
        %v1009 = vpop.f32.mrb[0].mxu0
        %1010 = vmatprep.mubr.f32.mxu0 0.0
        %1011 = vmatmul.mubr.f32.gmra.mrb[0].mxu0 %v885
        %v1012 = vpop.f32.mrb[0].mxu0
        %v1013 = vadd.f32 %v861, %v1012
        %v1014 = vpop.f32.mrb[0].mxu0
        %1015 = vmatprep.mubr.f32.mxu0 0.0
        %1016 = vmatmul.mubr.f32.gmra.mrb[0].mxu0 %v888
        %v1017 = vpop.f32.mrb[0].mxu0
        %v1018 = vadd.f32 %v861, %v1017
        %v1019 = vpop.f32.mrb[0].mxu0
        %1020 = vmatprep.mubr.f32.mxu0 0.0
        %1021 = vmatmul.mubr.f32.gmra.mrb[0].mxu0 %v891
        %v1022 = vpop.f32.mrb[0].mxu0
        %v1023 = vadd.f32 %v861, %v1022
        %v1024 = vpop.f32.mrb[0].mxu0
        %1025 = vmatprep.mubr.f32.mxu0 0.0
        %1026 = vmatmul.mubr.f32.gmra.mrb[0].mxu0 %v894
        %v1027 = vpop.f32.mrb[0].mxu0
        %v1028 = vadd.f32 %v861, %v1027
        %v1029 = vpop.f32.mrb[0].mxu0
        %1030 = vmatprep.mubr.f32.mxu0 0.0
        %1031 = vmatmul.mubr.f32.gmra.mrb[0].mxu0 %v897
        %v1032 = vpop.f32.mrb[0].mxu0
        %v1033 = vadd.f32 %v861, %v1032
        %v1034 = vpop.f32.mrb[0].mxu0
        %1035 = vmatprep.mubr.f32.mxu0 0.0
        %1036 = vmatmul.mubr.f32.gmra.mrb[0].mxu0 %v900
        %v1037 = vpop.f32.mrb[0].mxu0
        %v1038 = vadd.f32 %v861, %v1037
        %v1039 = vpop.f32.mrb[0].mxu0
        %1040 = vmatprep.mubr.f32.mxu0 0.0
        %1041 = vmatmul.mubr.f32.gmra.mrb[0].mxu0 %v903
        %v1042 = vpop.f32.mrb[0].mxu0
        %v1043 = vadd.f32 %v861, %v1042
        %v1044 = vpop.f32.mrb[0].mxu0
        %1045 = vmatprep.mubr.f32.mxu0 0.0
        %1046 = vmatmul.mubr.f32.gmra.mrb[0].mxu0 %v906
        %v1047 = vpop.f32.mrb[0].mxu0
        %v1048 = vadd.f32 %v861, %v1047
        %v1049 = vpop.f32.mrb[0].mxu0
        %1050 = vmatprep.mubr.f32.mxu0 0.0
        %1051 = vmatmul.mubr.f32.gmra.mrb[0].mxu0 %v909
        %v1052 = vpop.f32.mrb[0].mxu0
        %v1053 = vadd.f32 %v861, %v1052
        %v1054 = vpop.f32.mrb[0].mxu0
        %1055 = vdwg.mxu0
        %v1056 = vld [vmem:[%s8] sm:$0x1]
        %v1057 = vmul.f32 %v1056, 1.442695
        %v1058 = vpow.pop %v1057
        %v1059 = vld [vmem:[%s387] sm:$0xff]
        %v1060 = vld [vmem:[%s387 + $0x8] sm:$0xff]
        %v1061 = vld [vmem:[%s387 + $0x10] sm:$0xff]
        %v1062 = vld [vmem:[%s387 + $0x18] sm:$0xff]
        %v1063 = vld [vmem:[%s387 + $0x20] sm:$0xff]
        %v1064 = vld [vmem:[%s387 + $0x28] sm:$0xff]
        %v1065 = vld [vmem:[%s387 + $0x30] sm:$0xff]
        %v1066 = vld [vmem:[%s387 + $0x38] sm:$0xff]
        %v1067 = vld [vmem:[%s387 + $0x40] sm:$0xff]
        %v1068 = vld [vmem:[%s387 + $0x48] sm:$0xff]
        %v1069 = vld [vmem:[%s387 + $0x50] sm:$0xff]
        %v1070 = vld [vmem:[%s387 + $0x58] sm:$0xff]
        %v1071 = vld [vmem:[%s387 + $0x60] sm:$0xff]
        %v1072 = vld [vmem:[%s387 + $0x68] sm:$0xff]
        %v1073 = vld [vmem:[%s387 + $0x70] sm:$0xff]
        %v1074 = vld [vmem:[%s387 + $0x78] sm:$0xff]
        %v1076 = vlaneseq
        %v1077 = vshrl.u32 %v1076, 7
        %v1078 = vsub.s32 0, %v1077
        %v1079 = vrot.slane %v1058, %v1078
        %v1081 = vmul.f32 %v1079, %v1059
        %v1082 = vmul.f32 %v1079, %v1060
        %v1083 = vmul.f32 %v1079, %v1061
        %v1084 = vmul.f32 %v1079, %v1062
        %v1085 = vmul.f32 %v1079, %v1063
        %v1086 = vmul.f32 %v1079, %v1064
        %v1087 = vmul.f32 %v1079, %v1065
        %v1088 = vmul.f32 %v1079, %v1066
        %v1089 = vmul.f32 %v1079, %v1067
        %v1090 = vmul.f32 %v1079, %v1068
        %v1091 = vmul.f32 %v1079, %v1069
        %v1092 = vmul.f32 %v1079, %v1070
        %v1093 = vmul.f32 %v1079, %v1071
        %v1094 = vmul.f32 %v1079, %v1072
        %v1095 = vmul.f32 %v1079, %v1073
        %v1096 = vmul.f32 %v1079, %v1074
        %v1097 = vadd.f32 %v978, %v1081
        %v1098 = vadd.f32 %v983, %v1082
        %v1099 = vadd.f32 %v988, %v1083
        %v1100 = vadd.f32 %v993, %v1084
        %v1101 = vadd.f32 %v998, %v1085
        %v1102 = vadd.f32 %v1003, %v1086
        %v1103 = vadd.f32 %v1008, %v1087
        %v1104 = vadd.f32 %v1013, %v1088
        %v1105 = vadd.f32 %v1018, %v1089
        %v1106 = vadd.f32 %v1023, %v1090
        %v1107 = vadd.f32 %v1028, %v1091
        %v1108 = vadd.f32 %v1033, %v1092
        %v1109 = vadd.f32 %v1038, %v1093
        %v1110 = vadd.f32 %v1043, %v1094
        %v1111 = vadd.f32 %v1048, %v1095
        %v1112 = vadd.f32 %v1053, %v1096
        %v1113 = vmul.f32 %v1059, %v1059
        %v1114 = vmul.f32 %v1060, %v1060
        %v1115 = vmul.f32 %v1061, %v1061
        %v1116 = vmul.f32 %v1062, %v1062
        %v1117 = vmul.f32 %v1063, %v1063
        %v1118 = vmul.f32 %v1064, %v1064
        %v1119 = vmul.f32 %v1065, %v1065
        %v1120 = vmul.f32 %v1066, %v1066
        %v1121 = vmul.f32 %v1067, %v1067
        %v1122 = vmul.f32 %v1068, %v1068
        %v1123 = vmul.f32 %v1069, %v1069
        %v1124 = vmul.f32 %v1070, %v1070
        %v1125 = vmul.f32 %v1071, %v1071
        %v1126 = vmul.f32 %v1072, %v1072
        %v1127 = vmul.f32 %v1073, %v1073
        %v1128 = vmul.f32 %v1074, %v1074
        %vm1129 = vcmask 64512
        %v1130 = vsel %vm1129, %v1113, 0.0
        %1131 = vadd.xlane.f32.xlu0 %v1130
        %v1132 = vpop.xlane.xlu0 %1131
        %v1133 = vsel %vm1129, %v1114, 0.0
        %1134 = vadd.xlane.f32.xlu0 %v1133
        %v1135 = vpop.xlane.xlu0 %1134
        %v1136 = vsel %vm1129, %v1115, 0.0
        %1137 = vadd.xlane.f32.xlu0 %v1136
        %v1138 = vpop.xlane.xlu0 %1137
        %v1139 = vsel %vm1129, %v1116, 0.0
        %1140 = vadd.xlane.f32.xlu0 %v1139
        %v1141 = vpop.xlane.xlu0 %1140
        %v1142 = vsel %vm1129, %v1117, 0.0
        %1143 = vadd.xlane.f32.xlu0 %v1142
        %v1144 = vpop.xlane.xlu0 %1143
        %v1145 = vsel %vm1129, %v1118, 0.0
        %1146 = vadd.xlane.f32.xlu0 %v1145
        %v1147 = vpop.xlane.xlu0 %1146
        %v1148 = vsel %vm1129, %v1119, 0.0
        %1149 = vadd.xlane.f32.xlu0 %v1148
        %v1150 = vpop.xlane.xlu0 %1149
        %v1151 = vsel %vm1129, %v1120, 0.0
        %1152 = vadd.xlane.f32.xlu0 %v1151
        %v1153 = vpop.xlane.xlu0 %1152
        %v1154 = vsel %vm1129, %v1121, 0.0
        %1155 = vadd.xlane.f32.xlu0 %v1154
        %v1156 = vpop.xlane.xlu0 %1155
        %v1157 = vsel %vm1129, %v1122, 0.0
        %1158 = vadd.xlane.f32.xlu0 %v1157
        %v1159 = vpop.xlane.xlu0 %1158
        %v1160 = vsel %vm1129, %v1123, 0.0
        %1161 = vadd.xlane.f32.xlu0 %v1160
        %v1162 = vpop.xlane.xlu0 %1161
        %v1163 = vsel %vm1129, %v1124, 0.0
        %1164 = vadd.xlane.f32.xlu0 %v1163
        %v1165 = vpop.xlane.xlu0 %1164
        %v1166 = vsel %vm1129, %v1125, 0.0
        %1167 = vadd.xlane.f32.xlu0 %v1166
        %v1168 = vpop.xlane.xlu0 %1167
        %v1169 = vsel %vm1129, %v1126, 0.0
        %1170 = vadd.xlane.f32.xlu0 %v1169
        %v1171 = vpop.xlane.xlu0 %1170
        %v1172 = vsel %vm1129, %v1127, 0.0
        %1173 = vadd.xlane.f32.xlu0 %v1172
        %v1174 = vpop.xlane.xlu0 %1173
        %v1175 = vsel %vm1129, %v1128, 0.0
        %1176 = vadd.xlane.f32.xlu0 %v1175
        %v1177 = vpop.xlane.xlu0 %1176
        %v1178 = vmul.f32 %v1132, -0.5
        %v1179 = vmul.f32 %v1135, -0.5
        %v1180 = vmul.f32 %v1138, -0.5
        %v1181 = vmul.f32 %v1141, -0.5
        %v1182 = vmul.f32 %v1144, -0.5
        %v1183 = vmul.f32 %v1147, -0.5
        %v1184 = vmul.f32 %v1150, -0.5
        %v1185 = vmul.f32 %v1153, -0.5
        %v1186 = vmul.f32 %v1156, -0.5
        %v1187 = vmul.f32 %v1159, -0.5
        %v1188 = vmul.f32 %v1162, -0.5
        %v1189 = vmul.f32 %v1165, -0.5
        %v1190 = vmul.f32 %v1168, -0.5
        %v1191 = vmul.f32 %v1171, -0.5
        %v1192 = vmul.f32 %v1174, -0.5
        %v1193 = vmul.f32 %v1177, -0.5
        %1194 = vst.msk [vmem:[%s393] sm:$0xff] %vm1129, %v1097
        %1195 = vst.msk [vmem:[%s393 + $0x8] sm:$0xff] %vm1129, %v1098
        %1196 = vst.msk [vmem:[%s393 + $0x10] sm:$0xff] %vm1129, %v1099
        %1197 = vst.msk [vmem:[%s393 + $0x18] sm:$0xff] %vm1129, %v1100
        %1198 = vst.msk [vmem:[%s393 + $0x20] sm:$0xff] %vm1129, %v1101
        %1199 = vst.msk [vmem:[%s393 + $0x28] sm:$0xff] %vm1129, %v1102
        %1200 = vst.msk [vmem:[%s393 + $0x30] sm:$0xff] %vm1129, %v1103
        %1201 = vst.msk [vmem:[%s393 + $0x38] sm:$0xff] %vm1129, %v1104
        %1202 = vst.msk [vmem:[%s393 + $0x40] sm:$0xff] %vm1129, %v1105
        %1203 = vst.msk [vmem:[%s393 + $0x48] sm:$0xff] %vm1129, %v1106
        %1204 = vst.msk [vmem:[%s393 + $0x50] sm:$0xff] %vm1129, %v1107
        %1205 = vst.msk [vmem:[%s393 + $0x58] sm:$0xff] %vm1129, %v1108
        %1206 = vst.msk [vmem:[%s393 + $0x60] sm:$0xff] %vm1129, %v1109
        %1207 = vst.msk [vmem:[%s393 + $0x68] sm:$0xff] %vm1129, %v1110
        %1208 = vst.msk [vmem:[%s393 + $0x70] sm:$0xff] %vm1129, %v1111
        %1209 = vst.msk [vmem:[%s393 + $0x78] sm:$0xff] %vm1129, %v1112
        %1226 = vrot.lane.b32.xlu0 %v978, 8
        %v1227 = vpop.permute.xlu0 %1226
        %1228 = vrot.lane.b32.xlu0 %v983, 8
        %v1229 = vpop.permute.xlu0 %1228
        %1230 = vrot.lane.b32.xlu0 %v988, 8
        %v1231 = vpop.permute.xlu0 %1230
        %1232 = vrot.lane.b32.xlu0 %v993, 8
        %v1233 = vpop.permute.xlu0 %1232
        %1234 = vrot.lane.b32.xlu0 %v998, 8
        %v1235 = vpop.permute.xlu0 %1234
        %1236 = vrot.lane.b32.xlu0 %v1003, 8
        %v1237 = vpop.permute.xlu0 %1236
        %1238 = vrot.lane.b32.xlu0 %v1008, 8
        %v1239 = vpop.permute.xlu0 %1238
        %1240 = vrot.lane.b32.xlu0 %v1013, 8
        %v1241 = vpop.permute.xlu0 %1240
        %1242 = vrot.lane.b32.xlu0 %v1018, 8
        %v1243 = vpop.permute.xlu0 %1242
        %1244 = vrot.lane.b32.xlu0 %v1023, 8
        %v1245 = vpop.permute.xlu0 %1244
        %1246 = vrot.lane.b32.xlu0 %v1028, 8
        %v1247 = vpop.permute.xlu0 %1246
        %1248 = vrot.lane.b32.xlu0 %v1033, 8
        %v1249 = vpop.permute.xlu0 %1248
        %1250 = vrot.lane.b32.xlu0 %v1038, 8
        %v1251 = vpop.permute.xlu0 %1250
        %1252 = vrot.lane.b32.xlu0 %v1043, 8
        %v1253 = vpop.permute.xlu0 %1252
        %1254 = vrot.lane.b32.xlu0 %v1048, 8
        %v1255 = vpop.permute.xlu0 %1254
        %1256 = vrot.lane.b32.xlu0 %v1053, 8
        %v1257 = vpop.permute.xlu0 %1256
        %vm1274 = vcmask 130112
        %1275 = vst.msk [vmem:[%s393] sm:$0xff] %vm1274, %v1227
        %1276 = vst.msk [vmem:[%s393 + $0x8] sm:$0xff] %vm1274, %v1229
        %1277 = vst.msk [vmem:[%s393 + $0x10] sm:$0xff] %vm1274, %v1231
        %1278 = vst.msk [vmem:[%s393 + $0x18] sm:$0xff] %vm1274, %v1233
        %1279 = vst.msk [vmem:[%s393 + $0x20] sm:$0xff] %vm1274, %v1235
        %1280 = vst.msk [vmem:[%s393 + $0x28] sm:$0xff] %vm1274, %v1237
        %1281 = vst.msk [vmem:[%s393 + $0x30] sm:$0xff] %vm1274, %v1239
        %1282 = vst.msk [vmem:[%s393 + $0x38] sm:$0xff] %vm1274, %v1241
        %1283 = vst.msk [vmem:[%s393 + $0x40] sm:$0xff] %vm1274, %v1243
        %1284 = vst.msk [vmem:[%s393 + $0x48] sm:$0xff] %vm1274, %v1245
        %1285 = vst.msk [vmem:[%s393 + $0x50] sm:$0xff] %vm1274, %v1247
        %1286 = vst.msk [vmem:[%s393 + $0x58] sm:$0xff] %vm1274, %v1249
        %1287 = vst.msk [vmem:[%s393 + $0x60] sm:$0xff] %vm1274, %v1251
        %1288 = vst.msk [vmem:[%s393 + $0x68] sm:$0xff] %vm1274, %v1253
        %1289 = vst.msk [vmem:[%s393 + $0x70] sm:$0xff] %vm1274, %v1255
        %1290 = vst.msk [vmem:[%s393 + $0x78] sm:$0xff] %vm1274, %v1257
        %vm1291 = vcmask 138368
        %1292 = vst.msk [vmem:[%s393] sm:$0xff] %vm1291, %v1178
        %1293 = vst.msk [vmem:[%s393 + $0x8] sm:$0xff] %vm1291, %v1179
        %1294 = vst.msk [vmem:[%s393 + $0x10] sm:$0xff] %vm1291, %v1180
        %1295 = vst.msk [vmem:[%s393 + $0x18] sm:$0xff] %vm1291, %v1181
        %1296 = vst.msk [vmem:[%s393 + $0x20] sm:$0xff] %vm1291, %v1182
        %1297 = vst.msk [vmem:[%s393 + $0x28] sm:$0xff] %vm1291, %v1183
        %1298 = vst.msk [vmem:[%s393 + $0x30] sm:$0xff] %vm1291, %v1184
        %1299 = vst.msk [vmem:[%s393 + $0x38] sm:$0xff] %vm1291, %v1185
        %1300 = vst.msk [vmem:[%s393 + $0x40] sm:$0xff] %vm1291, %v1186
        %1301 = vst.msk [vmem:[%s393 + $0x48] sm:$0xff] %vm1291, %v1187
        %1302 = vst.msk [vmem:[%s393 + $0x50] sm:$0xff] %vm1291, %v1188
        %1303 = vst.msk [vmem:[%s393 + $0x58] sm:$0xff] %vm1291, %v1189
        %1304 = vst.msk [vmem:[%s393 + $0x60] sm:$0xff] %vm1291, %v1190
        %1305 = vst.msk [vmem:[%s393 + $0x68] sm:$0xff] %vm1291, %v1191
        %1306 = vst.msk [vmem:[%s393 + $0x70] sm:$0xff] %vm1291, %v1192
        %1307 = vst.msk [vmem:[%s393 + $0x78] sm:$0xff] %vm1291, %v1193
        %s1308 = smul.u32 %s25, 128
        %v1309 = vlaneseq
        %v1310 = vshrl.u32 %v1309, 7
        %v1311 = vadd.s32 %v1310, 8
        %v1312 = vadd.s32 %v1310, 16
        %v1313 = vadd.s32 %v1310, 24
        %v1314 = vadd.s32 %v1310, 32
        %v1315 = vadd.s32 %v1310, 40
        %v1316 = vadd.s32 %v1310, 48
        %v1317 = vadd.s32 %v1310, 56
        %v1318 = vadd.s32 %v1310, 64
        %v1319 = vadd.s32 %v1310, 72
        %v1320 = vadd.s32 %v1310, 80
        %v1321 = vadd.s32 %v1310, 88
        %v1322 = vadd.s32 %v1310, 96
        %v1323 = vadd.s32 %v1310, 104
        %v1324 = vadd.s32 %v1310, 112
        %v1325 = vadd.s32 %v1310, 120
        %v1326 = vstv %s1308
        %v1327 = vadd.s32 %v1326, %v1310
        %v1328 = vadd.s32 %v1326, %v1311
        %v1329 = vadd.s32 %v1326, %v1312
        %v1330 = vadd.s32 %v1326, %v1313
        %v1331 = vadd.s32 %v1326, %v1314
        %v1332 = vadd.s32 %v1326, %v1315
        %v1333 = vadd.s32 %v1326, %v1316
        %v1334 = vadd.s32 %v1326, %v1317
        %v1335 = vadd.s32 %v1326, %v1318
        %v1336 = vadd.s32 %v1326, %v1319
        %v1337 = vadd.s32 %v1326, %v1320
        %v1338 = vadd.s32 %v1326, %v1321
        %v1339 = vadd.s32 %v1326, %v1322
        %v1340 = vadd.s32 %v1326, %v1323
        %v1341 = vadd.s32 %v1326, %v1324
        %v1342 = vadd.s32 %v1326, %v1325
        %vm1343 = vcmp.lt.s32.totalorder %v1327, 250
        %vm1344 = vcmp.lt.s32.totalorder %v1328, 250
        %vm1345 = vcmp.lt.s32.totalorder %v1329, 250
        %vm1346 = vcmp.lt.s32.totalorder %v1330, 250
        %vm1347 = vcmp.lt.s32.totalorder %v1331, 250
        %vm1348 = vcmp.lt.s32.totalorder %v1332, 250
        %vm1349 = vcmp.lt.s32.totalorder %v1333, 250
        %vm1350 = vcmp.lt.s32.totalorder %v1334, 250
        %vm1351 = vcmp.lt.s32.totalorder %v1335, 250
        %vm1352 = vcmp.lt.s32.totalorder %v1336, 250
        %vm1353 = vcmp.lt.s32.totalorder %v1337, 250
        %vm1354 = vcmp.lt.s32.totalorder %v1338, 250
        %vm1355 = vcmp.lt.s32.totalorder %v1339, 250
        %vm1356 = vcmp.lt.s32.totalorder %v1340, 250
        %vm1357 = vcmp.lt.s32.totalorder %v1341, 250
        %vm1358 = vcmp.lt.s32.totalorder %v1342, 250
        %v1359 = vsel %vm1343, 1, 0
        %v1360 = vsel %vm1344, 1, 0
        %v1361 = vsel %vm1345, 1, 0
        %v1362 = vsel %vm1346, 1, 0
        %v1363 = vsel %vm1347, 1, 0
        %v1364 = vsel %vm1348, 1, 0
        %v1365 = vsel %vm1349, 1, 0
        %v1366 = vsel %vm1350, 1, 0
        %v1367 = vsel %vm1351, 1, 0
        %v1368 = vsel %vm1352, 1, 0
        %v1369 = vsel %vm1353, 1, 0
        %v1370 = vsel %vm1354, 1, 0
        %v1371 = vsel %vm1355, 1, 0
        %v1372 = vsel %vm1356, 1, 0
        %v1373 = vsel %vm1357, 1, 0
        %v1374 = vsel %vm1358, 1, 0
        %v1375 = vcvt.s32.f32 %v1359
        %v1376 = vcvt.s32.f32 %v1360
        %v1377 = vcvt.s32.f32 %v1361
        %v1378 = vcvt.s32.f32 %v1362
        %v1379 = vcvt.s32.f32 %v1363
        %v1380 = vcvt.s32.f32 %v1364
        %v1381 = vcvt.s32.f32 %v1365
        %v1382 = vcvt.s32.f32 %v1366
        %v1383 = vcvt.s32.f32 %v1367
        %v1384 = vcvt.s32.f32 %v1368
        %v1385 = vcvt.s32.f32 %v1369
        %v1386 = vcvt.s32.f32 %v1370
        %v1387 = vcvt.s32.f32 %v1371
        %v1388 = vcvt.s32.f32 %v1372
        %v1389 = vcvt.s32.f32 %v1373
        %v1390 = vcvt.s32.f32 %v1374
        %vm1391 = vcmp.eq.f32.partialorder %v615, 0.0
        %vm1392 = vcmp.eq.f32.partialorder %v616, 0.0
        %vm1393 = vcmp.eq.f32.partialorder %v617, 0.0
        %vm1394 = vcmp.eq.f32.partialorder %v618, 0.0
        %vm1395 = vcmp.eq.f32.partialorder %v619, 0.0
        %vm1396 = vcmp.eq.f32.partialorder %v620, 0.0
        %vm1397 = vcmp.eq.f32.partialorder %v621, 0.0
        %vm1398 = vcmp.eq.f32.partialorder %v622, 0.0
        %vm1399 = vcmp.eq.f32.partialorder %v623, 0.0
        %vm1400 = vcmp.eq.f32.partialorder %v624, 0.0
        %vm1401 = vcmp.eq.f32.partialorder %v625, 0.0
        %vm1402 = vcmp.eq.f32.partialorder %v626, 0.0
        %vm1403 = vcmp.eq.f32.partialorder %v627, 0.0
        %vm1404 = vcmp.eq.f32.partialorder %v628, 0.0
        %vm1405 = vcmp.eq.f32.partialorder %v629, 0.0
        %vm1406 = vcmp.eq.f32.partialorder %v630, 0.0
        %v1407 = vsel %vm1391, 1, 0
        %v1408 = vsel %vm1392, 1, 0
        %v1409 = vsel %vm1393, 1, 0
        %v1410 = vsel %vm1394, 1, 0
        %v1411 = vsel %vm1395, 1, 0
        %v1412 = vsel %vm1396, 1, 0
        %v1413 = vsel %vm1397, 1, 0
        %v1414 = vsel %vm1398, 1, 0
        %v1415 = vsel %vm1399, 1, 0
        %v1416 = vsel %vm1400, 1, 0
        %v1417 = vsel %vm1401, 1, 0
        %v1418 = vsel %vm1402, 1, 0
        %v1419 = vsel %vm1403, 1, 0
        %v1420 = vsel %vm1404, 1, 0
        %v1421 = vsel %vm1405, 1, 0
        %v1422 = vsel %vm1406, 1, 0
        %v1423 = vcvt.s32.f32 %v1407
        %v1424 = vcvt.s32.f32 %v1408
        %v1425 = vcvt.s32.f32 %v1409
        %v1426 = vcvt.s32.f32 %v1410
        %v1427 = vcvt.s32.f32 %v1411
        %v1428 = vcvt.s32.f32 %v1412
        %v1429 = vcvt.s32.f32 %v1413
        %v1430 = vcvt.s32.f32 %v1414
        %v1431 = vcvt.s32.f32 %v1415
        %v1432 = vcvt.s32.f32 %v1416
        %v1433 = vcvt.s32.f32 %v1417
        %v1434 = vcvt.s32.f32 %v1418
        %v1435 = vcvt.s32.f32 %v1419
        %v1436 = vcvt.s32.f32 %v1420
        %v1437 = vcvt.s32.f32 %v1421
        %v1438 = vcvt.s32.f32 %v1422
        %v1439 = vmul.f32 %v1423, %v1375
        %v1440 = vmul.f32 %v1424, %v1376
        %v1441 = vmul.f32 %v1425, %v1377
        %v1442 = vmul.f32 %v1426, %v1378
        %v1443 = vmul.f32 %v1427, %v1379
        %v1444 = vmul.f32 %v1428, %v1380
        %v1445 = vmul.f32 %v1429, %v1381
        %v1446 = vmul.f32 %v1430, %v1382
        %v1447 = vmul.f32 %v1431, %v1383
        %v1448 = vmul.f32 %v1432, %v1384
        %v1449 = vmul.f32 %v1433, %v1385
        %v1450 = vmul.f32 %v1434, %v1386
        %v1451 = vmul.f32 %v1435, %v1387
        %v1452 = vmul.f32 %v1436, %v1388
        %v1453 = vmul.f32 %v1437, %v1389
        %v1454 = vmul.f32 %v1438, %v1390
        %v1455 = vsel %vm642, %v1439, 0.0
        %v1456 = vsel %vm642, %v1440, 0.0
        %v1457 = vadd.f32 %v1455, %v1456
        %v1458 = vsel %vm642, %v1441, 0.0
        %v1459 = vadd.f32 %v1457, %v1458
        %v1460 = vsel %vm642, %v1442, 0.0
        %v1461 = vadd.f32 %v1459, %v1460
        %v1462 = vsel %vm642, %v1443, 0.0
        %v1463 = vadd.f32 %v1461, %v1462
        %v1464 = vsel %vm642, %v1444, 0.0
        %v1465 = vadd.f32 %v1463, %v1464
        %v1466 = vsel %vm642, %v1445, 0.0
        %v1467 = vadd.f32 %v1465, %v1466
        %v1468 = vsel %vm642, %v1446, 0.0
        %v1469 = vadd.f32 %v1467, %v1468
        %v1470 = vsel %vm642, %v1447, 0.0
        %v1471 = vadd.f32 %v1469, %v1470
        %v1472 = vsel %vm642, %v1448, 0.0
        %v1473 = vadd.f32 %v1471, %v1472
        %v1474 = vsel %vm642, %v1449, 0.0
        %v1475 = vadd.f32 %v1473, %v1474
        %v1476 = vsel %vm642, %v1450, 0.0
        %v1477 = vadd.f32 %v1475, %v1476
        %v1478 = vsel %vm642, %v1451, 0.0
        %v1479 = vadd.f32 %v1477, %v1478
        %v1480 = vsel %vm642, %v1452, 0.0
        %v1481 = vadd.f32 %v1479, %v1480
        %v1482 = vsel %vm642, %v1453, 0.0
        %v1483 = vadd.f32 %v1481, %v1482
        %v1484 = vsel %vm642, %v1454, 0.0
        %v1485 = vadd.f32 %v1483, %v1484
        %v1486 = vrot.slane %v1485, 4
        %v1487 = vadd.f32 %v1485, %v1486
        %v1488 = vrot.slane %v1487, 2
        %v1489 = vadd.f32 %v1487, %v1488
        %v1490 = vrot.slane %v1489, 1
        %v1491 = vadd.f32 %v1489, %v1490
        %vm1492 = vcmask 253952
        %1493 = vst.msk [vmem:[%s376] sm:$0x1] %vm1492, %v1491
        %vm1494 = vcmp.eq.f32.partialorder %v836, 0.0
        %vm1495 = vcmp.eq.f32.partialorder %v837, 0.0
        %vm1496 = vcmp.eq.f32.partialorder %v838, 0.0
        %vm1497 = vcmp.eq.f32.partialorder %v839, 0.0
        %vm1498 = vcmp.eq.f32.partialorder %v840, 0.0
        %vm1499 = vcmp.eq.f32.partialorder %v841, 0.0
        %vm1500 = vcmp.eq.f32.partialorder %v842, 0.0
        %vm1501 = vcmp.eq.f32.partialorder %v843, 0.0
        %vm1502 = vcmp.eq.f32.partialorder %v844, 0.0
        %vm1503 = vcmp.eq.f32.partialorder %v845, 0.0
        %vm1504 = vcmp.eq.f32.partialorder %v846, 0.0
        %vm1505 = vcmp.eq.f32.partialorder %v847, 0.0
        %vm1506 = vcmp.eq.f32.partialorder %v848, 0.0
        %vm1507 = vcmp.eq.f32.partialorder %v849, 0.0
        %vm1508 = vcmp.eq.f32.partialorder %v850, 0.0
        %vm1509 = vcmp.eq.f32.partialorder %v851, 0.0
        %v1510 = vsel %vm1494, 1, 0
        %v1511 = vsel %vm1495, 1, 0
        %v1512 = vsel %vm1496, 1, 0
        %v1513 = vsel %vm1497, 1, 0
        %v1514 = vsel %vm1498, 1, 0
        %v1515 = vsel %vm1499, 1, 0
        %v1516 = vsel %vm1500, 1, 0
        %v1517 = vsel %vm1501, 1, 0
        %v1518 = vsel %vm1502, 1, 0
        %v1519 = vsel %vm1503, 1, 0
        %v1520 = vsel %vm1504, 1, 0
        %v1521 = vsel %vm1505, 1, 0
        %v1522 = vsel %vm1506, 1, 0
        %v1523 = vsel %vm1507, 1, 0
        %v1524 = vsel %vm1508, 1, 0
        %v1525 = vsel %vm1509, 1, 0
        %v1526 = vcvt.s32.f32 %v1510
        %v1527 = vcvt.s32.f32 %v1511
        %v1528 = vcvt.s32.f32 %v1512
        %v1529 = vcvt.s32.f32 %v1513
        %v1530 = vcvt.s32.f32 %v1514
        %v1531 = vcvt.s32.f32 %v1515
        %v1532 = vcvt.s32.f32 %v1516
        %v1533 = vcvt.s32.f32 %v1517
        %v1534 = vcvt.s32.f32 %v1518
        %v1535 = vcvt.s32.f32 %v1519
        %v1536 = vcvt.s32.f32 %v1520
        %v1537 = vcvt.s32.f32 %v1521
        %v1538 = vcvt.s32.f32 %v1522
        %v1539 = vcvt.s32.f32 %v1523
        %v1540 = vcvt.s32.f32 %v1524
        %v1541 = vcvt.s32.f32 %v1525
        %v1542 = vmul.f32 %v1526, %v1375
        %v1543 = vmul.f32 %v1527, %v1376
        %v1544 = vmul.f32 %v1528, %v1377
        %v1545 = vmul.f32 %v1529, %v1378
        %v1546 = vmul.f32 %v1530, %v1379
        %v1547 = vmul.f32 %v1531, %v1380
        %v1548 = vmul.f32 %v1532, %v1381
        %v1549 = vmul.f32 %v1533, %v1382
        %v1550 = vmul.f32 %v1534, %v1383
        %v1551 = vmul.f32 %v1535, %v1384
        %v1552 = vmul.f32 %v1536, %v1385
        %v1553 = vmul.f32 %v1537, %v1386
        %v1554 = vmul.f32 %v1538, %v1387
        %v1555 = vmul.f32 %v1539, %v1388
        %v1556 = vmul.f32 %v1540, %v1389
        %v1557 = vmul.f32 %v1541, %v1390
        %v1558 = vsel %vm642, %v1542, 0.0
        %v1559 = vsel %vm642, %v1543, 0.0
        %v1560 = vadd.f32 %v1558, %v1559
        %v1561 = vsel %vm642, %v1544, 0.0
        %v1562 = vadd.f32 %v1560, %v1561
        %v1563 = vsel %vm642, %v1545, 0.0
        %v1564 = vadd.f32 %v1562, %v1563
        %v1565 = vsel %vm642, %v1546, 0.0
        %v1566 = vadd.f32 %v1564, %v1565
        %v1567 = vsel %vm642, %v1547, 0.0
        %v1568 = vadd.f32 %v1566, %v1567
        %v1569 = vsel %vm642, %v1548, 0.0
        %v1570 = vadd.f32 %v1568, %v1569
        %v1571 = vsel %vm642, %v1549, 0.0
        %v1572 = vadd.f32 %v1570, %v1571
        %v1573 = vsel %vm642, %v1550, 0.0
        %v1574 = vadd.f32 %v1572, %v1573
        %v1575 = vsel %vm642, %v1551, 0.0
        %v1576 = vadd.f32 %v1574, %v1575
        %v1577 = vsel %vm642, %v1552, 0.0
        %v1578 = vadd.f32 %v1576, %v1577
        %v1579 = vsel %vm642, %v1553, 0.0
        %v1580 = vadd.f32 %v1578, %v1579
        %v1581 = vsel %vm642, %v1554, 0.0
        %v1582 = vadd.f32 %v1580, %v1581
        %v1583 = vsel %vm642, %v1555, 0.0
        %v1584 = vadd.f32 %v1582, %v1583
        %v1585 = vsel %vm642, %v1556, 0.0
        %v1586 = vadd.f32 %v1584, %v1585
        %v1587 = vsel %vm642, %v1557, 0.0
        %v1588 = vadd.f32 %v1586, %v1587
        %v1589 = vrot.slane %v1588, 4
        %v1590 = vadd.f32 %v1588, %v1589
        %v1591 = vrot.slane %v1590, 2
        %v1592 = vadd.f32 %v1590, %v1591
        %v1593 = vrot.slane %v1592, 1
        %v1594 = vadd.f32 %v1592, %v1593
        %1596 = vrot.lane.b32.xlu0 %v1594, 32
        %v1597 = vpop.permute.xlu0 %1596
        %vm1599 = vcmask 516352
        %1600 = vst.msk [vmem:[%s376] sm:$0x1] %vm1599, %v1597
        %s1601 = smul.u32 16, %s25
        %p1602 = scmp.lt.s32.totalorder %s1601, 31
        %s1603 = scalar_select %p1602, %s1601, 31
        %s1604 = smul.addr %s1603, 8
        %s1605 = scalar_lea.vmem %s9, %s1604
        %s1606 = sand.u32 %s258, 1
        %s1607 = scalar_lea.sflag [#allocation3], %s1606
        %s1608 = sand.u32 %s258, 1
        %s1609 = scalar_lea.vmem [#allocation2], %s1608
        // Predicated region
        $region57: #{tpu_custom_call.1} parent=55 // pred_check
          %p1610 = pneg %p242
        $region58: #{tpu_custom_call.1} parent=55 // pred_check_branch
          %1612 = sbr.rel (%p1610) target = $region60
        $region59: #{tpu_custom_call.1} parent=55 // pred_region
          %s1613 = smul.u32 16, %s25
        $region60: #{tpu_custom_call.1} parent=55 // pred_fallthru
          _
        // Predicated region
        $region61: #{tpu_custom_call.1} parent=55 // pred_check
          %p1614 = pneg %p268
        $region62: #{tpu_custom_call.1} parent=55 // pred_check_branch
          %1616 = sbr.rel (%p1614) target = $region64
        $region63: #{tpu_custom_call.1} parent=55 // pred_region
          %s1618 = ssub.s32 16, 16
          %1619 = vsyncadd %s1607, %s1618
          %s1620 = smul.addr %s25, 16
          %s1621 = scalar_lea.hbm %s10, %s1620
          %s1623 = sshll.u32 %s1609, 4
          %s1624 = int_to_ptr.vmem [resolvable:$true] %s1623
          %1626 = dma.vmem_to_hbm [thread:$0]  %s1624, 16, %s1621, %s1607
        $region64: #{tpu_custom_call.1} parent=55 // pred_fallthru
          _
      $region56: #{tpu_custom_call.1} parent=5 // pred_fallthru
        _
      %p1627 = scmp.le.s32.totalorder 2, %s20
      // Predicated region
      $region65: #{tpu_custom_call.1} parent=5 // pred_check
        %p1628 = pneg %p1627
      $region66: #{tpu_custom_call.1} parent=5 // pred_check_branch
        %1630 = sbr.rel (%p1628) target = $region68
      $region67: #{tpu_custom_call.1} parent=5 // pred_region
        %s1631 = ssub.s32 %s20, 2
        // Predicated region
        $region69: #{tpu_custom_call.1} parent=67 // pred_check
          %p1632 = pneg %p248
        $region70: #{tpu_custom_call.1} parent=67 // pred_check_branch
          %1634 = sbr.rel (%p1632) target = $region72
        $region71: #{tpu_custom_call.1} parent=67 // pred_region
          %s1635 = smul.u32 16, %s26
          %p1636 = scmp.lt.s32.totalorder %s1635, 31
          %s1637 = scalar_select %p1636, %s1635, 31
          %s1638 = smul.addr %s1637, 8
          %s1639 = scalar_lea.vmem %s9, %s1638
        $region72: #{tpu_custom_call.1} parent=67 // pred_fallthru
          _
        // Predicated region
        $region73: #{tpu_custom_call.1} parent=67 // pred_check
          %p1640 = pneg %p274
        $region74: #{tpu_custom_call.1} parent=67 // pred_check_branch
          %1642 = sbr.rel (%p1640) target = $region76
        $region75: #{tpu_custom_call.1} parent=67 // pred_region
          %s1643 = sand.u32 %s259, 1
          %s1644 = scalar_lea.sflag [#allocation3], %s1643
          %s1645 = sand.u32 %s259, 1
          %s1646 = scalar_lea.vmem [#allocation2], %s1645
          %1647 = dma.done %s1644, 16
        $region76: #{tpu_custom_call.1} parent=67 // pred_fallthru
          _
      $region68: #{tpu_custom_call.1} parent=5 // pred_fallthru
        _
    $region6: #{tpu_custom_call.1} parent=1 // loop_footer
      %s24 = sadd.s32 1, %s20
    $region7: #{tpu_custom_call.1} parent=1 // loop_footer_branch
      %19 = sbr.rel target = $region3
    $region8: #{tpu_custom_call.1} parent=1 // loop_exit
      _
    %1648 = vsyncpa [#allocation3], 1
    %s1649 = scalar_lea.sflag [#allocation3], 1
    %1650 = vsyncpa %s1649, 1

</llo_original>
